<compile_context>
chip_gen: v5e
topology: v5e:2x2
jax: 0.10.0
libtpu: 0.0.40
codegen_flags: <defaults>
</compile_context>

<pallas_src>
import numpy as np

import jax
import jax.numpy as jnp
from jax import lax
from jax.experimental import pallas as pl
from jax.experimental.pallas import tpu as pltpu


# ----------------------------------------------------------------------------
# Static (numpy) row-selection / column-placement structure for k=3, stride=2
# ----------------------------------------------------------------------------
def _enc_row_select(h_in):
    """T[i, ho, h] = 1 iff h == 2*ho + i - 1  (Conv2d k=3, s=2, p=1)."""
    h_out = h_in // 2
    t = np.zeros((3, h_out, h_in), np.float32)
    for i in range(3):
        for ho in range(h_out):
            h = 2 * ho + i - 1
            if 0 <= h < h_in:
                t[i, ho, h] = 1.0
    return t


def _dec_row_select(h_in):
    """T[i, oh, ih] = 1 iff oh == 2*ih - 1 + i  (ConvT k=3, s=2, p=1, op=1)."""
    h_out = 2 * h_in
    t = np.zeros((3, h_out, h_in), np.float32)
    for i in range(3):
        for ih in range(h_in):
            oh = 2 * ih - 1 + i
            if 0 <= oh < h_out:
                t[i, oh, ih] = 1.0
    return t


def _enc_col_placement(w_in):
    """P[j, w, wo] = 1 iff w == 2*wo + j - 1."""
    w_out = w_in // 2
    p = np.zeros((3, w_in, w_out), np.float32)
    for j in range(3):
        for wo in range(w_out):
            w = 2 * wo + j - 1
            if 0 <= w < w_in:
                p[j, w, wo] = 1.0
    return p


def _dec_col_placement(w_in):
    """P[j, iw, ow] = 1 iff ow == 2*iw - 1 + j."""
    w_out = 2 * w_in
    p = np.zeros((3, w_in, w_out), np.float32)
    for j in range(3):
        for iw in range(w_in):
            ow = 2 * iw - 1 + j
            if 0 <= ow < w_out:
                p[j, iw, ow] = 1.0
    return p


# ----------------------------------------------------------------------------
# Per-layer operator construction (runs on weights only, outside the kernel)
# ----------------------------------------------------------------------------
def _conv_ops(w, b, h_in):
    """PyTorch Conv2d(stride=2, padding=1) weight (C_out, C_in, 3, 3)."""
    c_out, c_in, kh, kw = w.shape
    assert kh == 3 and kw == 3
    w_out = h_in // 2
    t = jnp.asarray(_enc_row_select(h_in))                  # (3, H_out, H_in) f32
    p = _enc_col_placement(h_in)                            # (3, W_in, W_out) np
    wm = jnp.transpose(w, (2, 3, 1, 0))                     # [i, j, ci, co]
    a = jnp.einsum("jwv,ijcd->iwcvd", p, wm)                # (3, W_in, C_in, W_out, C_out)
    a = a.reshape(3, h_in * c_in, w_out * c_out).astype(jnp.bfloat16)
    brow = jnp.tile(b, w_out).reshape(1, w_out * c_out).astype(jnp.float32)
    return t, a, brow


def _convT_ops(w, b, h_in):
    """PyTorch ConvTranspose2d(stride=2, padding=1, output_padding=1) weight
    (C_in, C_out, 3, 3)."""
    c_in, c_out, kh, kw = w.shape
    assert kh == 3 and kw == 3
    w_out = 2 * h_in
    t = jnp.asarray(_dec_row_select(h_in))                  # (3, 2*H_in, H_in) f32
    p = _dec_col_placement(h_in)                            # (3, W_in, 2*W_in) np
    wm = jnp.transpose(w, (2, 3, 0, 1))                     # [i, j, ci, co]
    a = jnp.einsum("jwv,ijcd->iwcvd", p, wm)
    a = a.reshape(3, h_in * c_in, w_out * c_out).astype(jnp.bfloat16)
    brow = jnp.tile(b, w_out).reshape(1, w_out * c_out).astype(jnp.float32)
    return t, a, brow


# ----------------------------------------------------------------------------
# Fused whole-network Pallas kernel (one image slab per grid step)
# ----------------------------------------------------------------------------
def _autoencoder_kernel(*refs):
    x_ref = refs[0]
    layer_refs = refs[1:-1]
    o_ref = refs[-1]
    n_layers = len(layer_refs) // 3

    x = x_ref[...]                                          # (H0, W0) f32 slab
    for l in range(n_layers):
        t_ref, a_ref, b_ref = layer_refs[3 * l: 3 * l + 3]
        acc = None
        for i in range(3):                                  # 3 kernel-row taps
            rows = jnp.dot(t_ref[i], x, preferred_element_type=jnp.float32)
            part = jnp.dot(rows.astype(jnp.bfloat16), a_ref[i],
                           preferred_element_type=jnp.float32)
            acc = part if acc is None else acc + part
        y = acc + b_ref[...]                                # bias (1, N), f32
        if l + 1 < n_layers:
            x = jnp.maximum(y, 0.0)                         # ReLU
        else:
            x = 1.0 / (1.0 + jnp.exp(-y))                   # exact sigmoid in [0,1]
    o_ref[...] = x


# ----------------------------------------------------------------------------
# Forward pass (PyTorch-shaped params, NCHW in / NCHW out)
# ----------------------------------------------------------------------------
def autoencoder_forward(x, params):
    B, C, H, W = x.shape
    assert C == 1 and H == W and H % 8 == 0

    # Weight preprocessing (independent of x; pure weight-side glue).
    specs = []
    s = H
    specs.append(_conv_ops(params["e1_w"], params["e1_b"], s)); s //= 2
    specs.append(_conv_ops(params["e2_w"], params["e2_b"], s)); s //= 2
    specs.append(_conv_ops(params["e3_w"], params["e3_b"], s)); s //= 2
    specs.append(_convT_ops(params["d1_w"], params["d1_b"], s)); s *= 2
    specs.append(_convT_ops(params["d2_w"], params["d2_b"], s)); s *= 2
    specs.append(_convT_ops(params["d3_w"], params["d3_b"], s)); s *= 2
    assert s == H

    # Single layout change at module entry: NCHW (C=1) -> per-image row slab.
    x_slab = x.reshape(B * H, W)

    operands = [x_slab]
    in_specs = [pl.BlockSpec((H, W), lambda b: (b, 0))]
    for (t, a, brow) in specs:
        operands += [t, a, brow]
        in_specs += [
            pl.BlockSpec(t.shape, lambda b: (0, 0, 0)),     # resident across grid
            pl.BlockSpec(a.shape, lambda b: (0, 0, 0)),
            pl.BlockSpec(brow.shape, lambda b: (0, 0)),
        ]

    out = pl.pallas_call(
        _autoencoder_kernel,
        out_shape=jax.ShapeDtypeStruct((B * H, W), jnp.float32),
        grid=(B,),
        in_specs=in_specs,
        out_specs=pl.BlockSpec((H, W), lambda b: (b, 0)),
        compiler_params=pltpu.CompilerParams(
            dimension_semantics=("parallel",)),
    )(*operands)

    return out.reshape(B, 1, H, W)


# ----------------------------------------------------------------------------
# Pure-JAX reference (XLA convs) for a numerical self-check
# ----------------------------------------------------------------------------
def _reference_forward(x, params):
    dn = ("NCHW", "OIHW", "NCHW")
    h = x
    for l in range(1, 4):
        w, b = params[f"e{l}_w"], params[f"e{l}_b"]
        h = lax.conv_general_dilated(h, w, (2, 2), [(1, 1), (1, 1)],
                                     dimension_numbers=dn)
        h = jnp.maximum(h + b[None, :, None, None], 0.0)
    for l in range(1, 4):
        w, b = params[f"d{l}_w"], params[f"d{l}_b"]
        w_eq = jnp.transpose(w, (1, 0, 2, 3))[:, :, ::-1, ::-1]
        h = lax.conv_general_dilated(h, w_eq, (1, 1), [(1, 2), (1, 2)],
                                     lhs_dilation=(2, 2), dimension_numbers=dn)
        h = h + b[None, :, None, None]
        h = jnp.maximum(h, 0.0) if l < 3 else jax.nn.sigmoid(h)
    return h


# ----------------------------------------------------------------------------
# Parameter init (deterministic, PyTorch-shaped)
# ----------------------------------------------------------------------------
def init_params(key):
    def uinit(k, shape, fan_in):
        bound = 1.0 / jnp.sqrt(jnp.float32(fan_in))
        return jax.random.uniform(k, shape, jnp.float32, -bound, bound)

    keys = jax.random.split(key, 12)
    p = {}
    enc_shapes = [(16, 1, 3, 3), (32, 16, 3, 3), (64, 32, 3, 3)]
    for n, (shape, kw_, kb_) in enumerate(zip(enc_shapes, keys[0:3], keys[3:6])):
        fan_in = shape[1] * shape[2] * shape[3]
        p[f"e{n+1}_w"] = uinit(kw_, shape, fan_in)
        p[f"e{n+1}_b"] = uinit(kb_, (shape[0],), fan_in)
    dec_shapes = [(64, 32, 3, 3), (32, 16, 3, 3), (16, 1, 3, 3)]
    for n, (shape, kw_, kb_) in enumerate(zip(dec_shapes, keys[6:9], keys[9:12])):
        fan_in = shape[1] * shape[2] * shape[3]
        p[f"d{n+1}_w"] = uinit(kw_, shape, fan_in)
        p[f"d{n+1}_b"] = uinit(kb_, (shape[1],), fan_in)
    return p


if __name__ == "__main__":
    key = jax.random.PRNGKey(0)
    k_param, k_x = jax.random.split(key)
    params = init_params(k_param)

    # small NCHW input: batch=2, 1 channel, 16x16 spatial
    x = jax.random.uniform(k_x, (2, 1, 16, 16), jnp.float32)

    fwd = jax.jit(autoencoder_forward)
    y = jax.block_until_ready(fwd(x, params))

    assert y.shape == (2, 1, 16, 16), y.shape
    assert y.dtype == jnp.float32
    assert bool(jnp.all((y >= 0.0) & (y <= 1.0)))  # sigmoid output range

    # numerical self-check vs pure-JAX reference (bf16 MXU weights -> loose tol)
    y_ref = jax.block_until_ready(jax.jit(_reference_forward)(x, params))
    err = float(jnp.max(jnp.abs(y - y_ref)))
    assert err < 5e-2, f"max |pallas - reference| = {err}"

    print("KERNEL_OK")
</pallas_src>

<mosaic_0001>
module attributes {stable_mosaic.version = 11 : i64} {
  func.func @_autoencoder_kernel(%arg0: i32, %arg1: memref<16x16xf32, #tpu.memory_space<vmem>>, %arg2: memref<3x8x16xf32, #tpu.memory_space<vmem>>, %arg3: memref<3x16x128xbf16, #tpu.memory_space<vmem>>, %arg4: memref<1x128xf32, #tpu.memory_space<vmem>>, %arg5: memref<3x4x8xf32, #tpu.memory_space<vmem>>, %arg6: memref<3x128x128xbf16, #tpu.memory_space<vmem>>, %arg7: memref<1x128xf32, #tpu.memory_space<vmem>>, %arg8: memref<3x2x4xf32, #tpu.memory_space<vmem>>, %arg9: memref<3x128x128xbf16, #tpu.memory_space<vmem>>, %arg10: memref<1x128xf32, #tpu.memory_space<vmem>>, %arg11: memref<3x4x2xf32, #tpu.memory_space<vmem>>, %arg12: memref<3x128x128xbf16, #tpu.memory_space<vmem>>, %arg13: memref<1x128xf32, #tpu.memory_space<vmem>>, %arg14: memref<3x8x4xf32, #tpu.memory_space<vmem>>, %arg15: memref<3x128x128xbf16, #tpu.memory_space<vmem>>, %arg16: memref<1x128xf32, #tpu.memory_space<vmem>>, %arg17: memref<3x16x8xf32, #tpu.memory_space<vmem>>, %arg18: memref<3x128x16xbf16, #tpu.memory_space<vmem>>, %arg19: memref<1x16xf32, #tpu.memory_space<vmem>>, %arg20: memref<16x16xf32, #tpu.memory_space<vmem>>) attributes {dimension_semantics = [#tpu.dimension_semantics<parallel>], iteration_bounds = array<i64: 2>, scalar_prefetch = 0 : i64, scratch_operands = 0 : i64, tpu.core_type = #tpu.core_type<tc>, window_params = [{transform_indices = @transform_0, window_bounds = array<i64: 16, 16>}, {pipeline_mode = #tpu.pipeline_mode<synchronous>, transform_indices = @transform_1, window_bounds = array<i64: 3, 8, 16>}, {pipeline_mode = #tpu.pipeline_mode<synchronous>, transform_indices = @transform_2, window_bounds = array<i64: 3, 16, 128>}, {pipeline_mode = #tpu.pipeline_mode<synchronous>, transform_indices = @transform_3, window_bounds = array<i64: 1, 128>}, {pipeline_mode = #tpu.pipeline_mode<synchronous>, transform_indices = @transform_4, window_bounds = array<i64: 3, 4, 8>}, {pipeline_mode = #tpu.pipeline_mode<synchronous>, transform_indices = @transform_5, window_bounds = array<i64: 3, 128, 128>}, {pipeline_mode = #tpu.pipeline_mode<synchronous>, transform_indices = @transform_6, window_bounds = array<i64: 1, 128>}, {pipeline_mode = #tpu.pipeline_mode<synchronous>, transform_indices = @transform_7, window_bounds = array<i64: 3, 2, 4>}, {pipeline_mode = #tpu.pipeline_mode<synchronous>, transform_indices = @transform_8, window_bounds = array<i64: 3, 128, 128>}, {pipeline_mode = #tpu.pipeline_mode<synchronous>, transform_indices = @transform_9, window_bounds = array<i64: 1, 128>}, {pipeline_mode = #tpu.pipeline_mode<synchronous>, transform_indices = @transform_10, window_bounds = array<i64: 3, 4, 2>}, {pipeline_mode = #tpu.pipeline_mode<synchronous>, transform_indices = @transform_11, window_bounds = array<i64: 3, 128, 128>}, {pipeline_mode = #tpu.pipeline_mode<synchronous>, transform_indices = @transform_12, window_bounds = array<i64: 1, 128>}, {pipeline_mode = #tpu.pipeline_mode<synchronous>, transform_indices = @transform_13, window_bounds = array<i64: 3, 8, 4>}, {pipeline_mode = #tpu.pipeline_mode<synchronous>, transform_indices = @transform_14, window_bounds = array<i64: 3, 128, 128>}, {pipeline_mode = #tpu.pipeline_mode<synchronous>, transform_indices = @transform_15, window_bounds = array<i64: 1, 128>}, {pipeline_mode = #tpu.pipeline_mode<synchronous>, transform_indices = @transform_16, window_bounds = array<i64: 3, 16, 8>}, {pipeline_mode = #tpu.pipeline_mode<synchronous>, transform_indices = @transform_17, window_bounds = array<i64: 3, 128, 16>}, {pipeline_mode = #tpu.pipeline_mode<synchronous>, transform_indices = @transform_18, window_bounds = array<i64: 1, 16>}, {transform_indices = @transform_19, window_bounds = array<i64: 16, 16>}]} {
    %c0 = arith.constant 0 : index
    %c0_0 = arith.constant 0 : index
    %0 = vector.load %arg1[%c0, %c0_0] : memref<16x16xf32, #tpu.memory_space<vmem>>, vector<16x16xf32>
    %c0_1 = arith.constant 0 : index
    %c0_2 = arith.constant 0 : index
    %c0_3 = arith.constant 0 : index
    %1 = vector.load %arg2[%c0_1, %c0_2, %c0_3] : memref<3x8x16xf32, #tpu.memory_space<vmem>>, vector<1x8x16xf32>
    %2 = vector.shape_cast %1 : vector<1x8x16xf32> to vector<8x16xf32>
    %cst = arith.constant dense<0.000000e+00> : vector<8x16xf32>
    %3 = tpu.matmul %2, %0, %cst {dimension_numbers = #tpu.dot_dimension_numbers<[1], [0], [0], [1], [0, 0, 1, 1], [], []>} : vector<8x16xf32>, vector<16x16xf32>, vector<8x16xf32> -> vector<8x16xf32>
    %4 = arith.truncf %3 : vector<8x16xf32> to vector<8x16xbf16>
    %c0_4 = arith.constant 0 : index
    %c0_5 = arith.constant 0 : index
    %c0_6 = arith.constant 0 : index
    %5 = vector.load %arg3[%c0_4, %c0_5, %c0_6] : memref<3x16x128xbf16, #tpu.memory_space<vmem>>, vector<1x16x128xbf16>
    %6 = vector.shape_cast %5 : vector<1x16x128xbf16> to vector<16x128xbf16>
    %cst_7 = arith.constant dense<0.000000e+00> : vector<8x128xf32>
    %7 = tpu.matmul %4, %6, %cst_7 {dimension_numbers = #tpu.dot_dimension_numbers<[1], [0], [0], [1], [0, 0, 1, 1], [], []>} : vector<8x16xbf16>, vector<16x128xbf16>, vector<8x128xf32> -> vector<8x128xf32>
    %c1 = arith.constant 1 : index
    %c0_8 = arith.constant 0 : index
    %c0_9 = arith.constant 0 : index
    %8 = vector.load %arg2[%c1, %c0_8, %c0_9] : memref<3x8x16xf32, #tpu.memory_space<vmem>>, vector<1x8x16xf32>
    %9 = vector.shape_cast %8 : vector<1x8x16xf32> to vector<8x16xf32>
    %cst_10 = arith.constant dense<0.000000e+00> : vector<8x16xf32>
    %10 = tpu.matmul %9, %0, %cst_10 {dimension_numbers = #tpu.dot_dimension_numbers<[1], [0], [0], [1], [0, 0, 1, 1], [], []>} : vector<8x16xf32>, vector<16x16xf32>, vector<8x16xf32> -> vector<8x16xf32>
    %11 = arith.truncf %10 : vector<8x16xf32> to vector<8x16xbf16>
    %c1_11 = arith.constant 1 : index
    %c0_12 = arith.constant 0 : index
    %c0_13 = arith.constant 0 : index
    %12 = vector.load %arg3[%c1_11, %c0_12, %c0_13] : memref<3x16x128xbf16, #tpu.memory_space<vmem>>, vector<1x16x128xbf16>
    %13 = vector.shape_cast %12 : vector<1x16x128xbf16> to vector<16x128xbf16>
    %cst_14 = arith.constant dense<0.000000e+00> : vector<8x128xf32>
    %14 = tpu.matmul %11, %13, %cst_14 {dimension_numbers = #tpu.dot_dimension_numbers<[1], [0], [0], [1], [0, 0, 1, 1], [], []>} : vector<8x16xbf16>, vector<16x128xbf16>, vector<8x128xf32> -> vector<8x128xf32>
    %15 = arith.addf %7, %14 : vector<8x128xf32>
    %c2 = arith.constant 2 : index
    %c0_15 = arith.constant 0 : index
    %c0_16 = arith.constant 0 : index
    %16 = vector.load %arg2[%c2, %c0_15, %c0_16] : memref<3x8x16xf32, #tpu.memory_space<vmem>>, vector<1x8x16xf32>
    %17 = vector.shape_cast %16 : vector<1x8x16xf32> to vector<8x16xf32>
    %cst_17 = arith.constant dense<0.000000e+00> : vector<8x16xf32>
    %18 = tpu.matmul %17, %0, %cst_17 {dimension_numbers = #tpu.dot_dimension_numbers<[1], [0], [0], [1], [0, 0, 1, 1], [], []>} : vector<8x16xf32>, vector<16x16xf32>, vector<8x16xf32> -> vector<8x16xf32>
    %19 = arith.truncf %18 : vector<8x16xf32> to vector<8x16xbf16>
    %c2_18 = arith.constant 2 : index
    %c0_19 = arith.constant 0 : index
    %c0_20 = arith.constant 0 : index
    %20 = vector.load %arg3[%c2_18, %c0_19, %c0_20] : memref<3x16x128xbf16, #tpu.memory_space<vmem>>, vector<1x16x128xbf16>
    %21 = vector.shape_cast %20 : vector<1x16x128xbf16> to vector<16x128xbf16>
    %cst_21 = arith.constant dense<0.000000e+00> : vector<8x128xf32>
    %22 = tpu.matmul %19, %21, %cst_21 {dimension_numbers = #tpu.dot_dimension_numbers<[1], [0], [0], [1], [0, 0, 1, 1], [], []>} : vector<8x16xbf16>, vector<16x128xbf16>, vector<8x128xf32> -> vector<8x128xf32>
    %23 = arith.addf %15, %22 : vector<8x128xf32>
    %c0_22 = arith.constant 0 : index
    %c0_23 = arith.constant 0 : index
    %24 = vector.load %arg4[%c0_22, %c0_23] : memref<1x128xf32, #tpu.memory_space<vmem>>, vector<1x128xf32>
    %25 = vector.broadcast %24 : vector<1x128xf32> to vector<8x128xf32>
    %26 = arith.addf %23, %25 : vector<8x128xf32>
    %cst_24 = arith.constant 0.000000e+00 : f32
    %27 = vector.broadcast %cst_24 : f32 to vector<8x128xf32>
    %28 = arith.maximumf %26, %27 : vector<8x128xf32>
    %c0_25 = arith.constant 0 : index
    %c0_26 = arith.constant 0 : index
    %c0_27 = arith.constant 0 : index
    %29 = vector.load %arg5[%c0_25, %c0_26, %c0_27] : memref<3x4x8xf32, #tpu.memory_space<vmem>>, vector<1x4x8xf32>
    %30 = vector.shape_cast %29 : vector<1x4x8xf32> to vector<4x8xf32>
    %cst_28 = arith.constant dense<0.000000e+00> : vector<4x128xf32>
    %31 = tpu.matmul %30, %28, %cst_28 {dimension_numbers = #tpu.dot_dimension_numbers<[1], [0], [0], [1], [0, 0, 1, 1], [], []>} : vector<4x8xf32>, vector<8x128xf32>, vector<4x128xf32> -> vector<4x128xf32>
    %32 = arith.truncf %31 : vector<4x128xf32> to vector<4x128xbf16>
    %c0_29 = arith.constant 0 : index
    %c0_30 = arith.constant 0 : index
    %c0_31 = arith.constant 0 : index
    %33 = vector.load %arg6[%c0_29, %c0_30, %c0_31] : memref<3x128x128xbf16, #tpu.memory_space<vmem>>, vector<1x128x128xbf16>
    %34 = vector.shape_cast %33 : vector<1x128x128xbf16> to vector<128x128xbf16>
    %cst_32 = arith.constant dense<0.000000e+00> : vector<4x128xf32>
    %35 = tpu.matmul %32, %34, %cst_32 {dimension_numbers = #tpu.dot_dimension_numbers<[1], [0], [0], [1], [0, 0, 1, 1], [], []>} : vector<4x128xbf16>, vector<128x128xbf16>, vector<4x128xf32> -> vector<4x128xf32>
    %c1_33 = arith.constant 1 : index
    %c0_34 = arith.constant 0 : index
    %c0_35 = arith.constant 0 : index
    %36 = vector.load %arg5[%c1_33, %c0_34, %c0_35] : memref<3x4x8xf32, #tpu.memory_space<vmem>>, vector<1x4x8xf32>
    %37 = vector.shape_cast %36 : vector<1x4x8xf32> to vector<4x8xf32>
    %cst_36 = arith.constant dense<0.000000e+00> : vector<4x128xf32>
    %38 = tpu.matmul %37, %28, %cst_36 {dimension_numbers = #tpu.dot_dimension_numbers<[1], [0], [0], [1], [0, 0, 1, 1], [], []>} : vector<4x8xf32>, vector<8x128xf32>, vector<4x128xf32> -> vector<4x128xf32>
    %39 = arith.truncf %38 : vector<4x128xf32> to vector<4x128xbf16>
    %c1_37 = arith.constant 1 : index
    %c0_38 = arith.constant 0 : index
    %c0_39 = arith.constant 0 : index
    %40 = vector.load %arg6[%c1_37, %c0_38, %c0_39] : memref<3x128x128xbf16, #tpu.memory_space<vmem>>, vector<1x128x128xbf16>
    %41 = vector.shape_cast %40 : vector<1x128x128xbf16> to vector<128x128xbf16>
    %cst_40 = arith.constant dense<0.000000e+00> : vector<4x128xf32>
    %42 = tpu.matmul %39, %41, %cst_40 {dimension_numbers = #tpu.dot_dimension_numbers<[1], [0], [0], [1], [0, 0, 1, 1], [], []>} : vector<4x128xbf16>, vector<128x128xbf16>, vector<4x128xf32> -> vector<4x128xf32>
    %43 = arith.addf %35, %42 : vector<4x128xf32>
    %c2_41 = arith.constant 2 : index
    %c0_42 = arith.constant 0 : index
    %c0_43 = arith.constant 0 : index
    %44 = vector.load %arg5[%c2_41, %c0_42, %c0_43] : memref<3x4x8xf32, #tpu.memory_space<vmem>>, vector<1x4x8xf32>
    %45 = vector.shape_cast %44 : vector<1x4x8xf32> to vector<4x8xf32>
    %cst_44 = arith.constant dense<0.000000e+00> : vector<4x128xf32>
    %46 = tpu.matmul %45, %28, %cst_44 {dimension_numbers = #tpu.dot_dimension_numbers<[1], [0], [0], [1], [0, 0, 1, 1], [], []>} : vector<4x8xf32>, vector<8x128xf32>, vector<4x128xf32> -> vector<4x128xf32>
    %47 = arith.truncf %46 : vector<4x128xf32> to vector<4x128xbf16>
    %c2_45 = arith.constant 2 : index
    %c0_46 = arith.constant 0 : index
    %c0_47 = arith.constant 0 : index
    %48 = vector.load %arg6[%c2_45, %c0_46, %c0_47] : memref<3x128x128xbf16, #tpu.memory_space<vmem>>, vector<1x128x128xbf16>
    %49 = vector.shape_cast %48 : vector<1x128x128xbf16> to vector<128x128xbf16>
    %cst_48 = arith.constant dense<0.000000e+00> : vector<4x128xf32>
    %50 = tpu.matmul %47, %49, %cst_48 {dimension_numbers = #tpu.dot_dimension_numbers<[1], [0], [0], [1], [0, 0, 1, 1], [], []>} : vector<4x128xbf16>, vector<128x128xbf16>, vector<4x128xf32> -> vector<4x128xf32>
    %51 = arith.addf %43, %50 : vector<4x128xf32>
    %c0_49 = arith.constant 0 : index
    %c0_50 = arith.constant 0 : index
    %52 = vector.load %arg7[%c0_49, %c0_50] : memref<1x128xf32, #tpu.memory_space<vmem>>, vector<1x128xf32>
    %53 = vector.broadcast %52 : vector<1x128xf32> to vector<4x128xf32>
    %54 = arith.addf %51, %53 : vector<4x128xf32>
    %cst_51 = arith.constant 0.000000e+00 : f32
    %55 = vector.broadcast %cst_51 : f32 to vector<4x128xf32>
    %56 = arith.maximumf %54, %55 : vector<4x128xf32>
    %c0_52 = arith.constant 0 : index
    %c0_53 = arith.constant 0 : index
    %c0_54 = arith.constant 0 : index
    %57 = vector.load %arg8[%c0_52, %c0_53, %c0_54] : memref<3x2x4xf32, #tpu.memory_space<vmem>>, vector<1x2x4xf32>
    %58 = vector.shape_cast %57 : vector<1x2x4xf32> to vector<2x4xf32>
    %cst_55 = arith.constant dense<0.000000e+00> : vector<2x128xf32>
    %59 = tpu.matmul %58, %56, %cst_55 {dimension_numbers = #tpu.dot_dimension_numbers<[1], [0], [0], [1], [0, 0, 1, 1], [], []>} : vector<2x4xf32>, vector<4x128xf32>, vector<2x128xf32> -> vector<2x128xf32>
    %60 = arith.truncf %59 : vector<2x128xf32> to vector<2x128xbf16>
    %c0_56 = arith.constant 0 : index
    %c0_57 = arith.constant 0 : index
    %c0_58 = arith.constant 0 : index
    %61 = vector.load %arg9[%c0_56, %c0_57, %c0_58] : memref<3x128x128xbf16, #tpu.memory_space<vmem>>, vector<1x128x128xbf16>
    %62 = vector.shape_cast %61 : vector<1x128x128xbf16> to vector<128x128xbf16>
    %cst_59 = arith.constant dense<0.000000e+00> : vector<2x128xf32>
    %63 = tpu.matmul %60, %62, %cst_59 {dimension_numbers = #tpu.dot_dimension_numbers<[1], [0], [0], [1], [0, 0, 1, 1], [], []>} : vector<2x128xbf16>, vector<128x128xbf16>, vector<2x128xf32> -> vector<2x128xf32>
    %c1_60 = arith.constant 1 : index
    %c0_61 = arith.constant 0 : index
    %c0_62 = arith.constant 0 : index
    %64 = vector.load %arg8[%c1_60, %c0_61, %c0_62] : memref<3x2x4xf32, #tpu.memory_space<vmem>>, vector<1x2x4xf32>
    %65 = vector.shape_cast %64 : vector<1x2x4xf32> to vector<2x4xf32>
    %cst_63 = arith.constant dense<0.000000e+00> : vector<2x128xf32>
    %66 = tpu.matmul %65, %56, %cst_63 {dimension_numbers = #tpu.dot_dimension_numbers<[1], [0], [0], [1], [0, 0, 1, 1], [], []>} : vector<2x4xf32>, vector<4x128xf32>, vector<2x128xf32> -> vector<2x128xf32>
    %67 = arith.truncf %66 : vector<2x128xf32> to vector<2x128xbf16>
    %c1_64 = arith.constant 1 : index
    %c0_65 = arith.constant 0 : index
    %c0_66 = arith.constant 0 : index
    %68 = vector.load %arg9[%c1_64, %c0_65, %c0_66] : memref<3x128x128xbf16, #tpu.memory_space<vmem>>, vector<1x128x128xbf16>
    %69 = vector.shape_cast %68 : vector<1x128x128xbf16> to vector<128x128xbf16>
    %cst_67 = arith.constant dense<0.000000e+00> : vector<2x128xf32>
    %70 = tpu.matmul %67, %69, %cst_67 {dimension_numbers = #tpu.dot_dimension_numbers<[1], [0], [0], [1], [0, 0, 1, 1], [], []>} : vector<2x128xbf16>, vector<128x128xbf16>, vector<2x128xf32> -> vector<2x128xf32>
    %71 = arith.addf %63, %70 : vector<2x128xf32>
    %c2_68 = arith.constant 2 : index
    %c0_69 = arith.constant 0 : index
    %c0_70 = arith.constant 0 : index
    %72 = vector.load %arg8[%c2_68, %c0_69, %c0_70] : memref<3x2x4xf32, #tpu.memory_space<vmem>>, vector<1x2x4xf32>
    %73 = vector.shape_cast %72 : vector<1x2x4xf32> to vector<2x4xf32>
    %cst_71 = arith.constant dense<0.000000e+00> : vector<2x128xf32>
    %74 = tpu.matmul %73, %56, %cst_71 {dimension_numbers = #tpu.dot_dimension_numbers<[1], [0], [0], [1], [0, 0, 1, 1], [], []>} : vector<2x4xf32>, vector<4x128xf32>, vector<2x128xf32> -> vector<2x128xf32>
    %75 = arith.truncf %74 : vector<2x128xf32> to vector<2x128xbf16>
    %c2_72 = arith.constant 2 : index
    %c0_73 = arith.constant 0 : index
    %c0_74 = arith.constant 0 : index
    %76 = vector.load %arg9[%c2_72, %c0_73, %c0_74] : memref<3x128x128xbf16, #tpu.memory_space<vmem>>, vector<1x128x128xbf16>
    %77 = vector.shape_cast %76 : vector<1x128x128xbf16> to vector<128x128xbf16>
    %cst_75 = arith.constant dense<0.000000e+00> : vector<2x128xf32>
    %78 = tpu.matmul %75, %77, %cst_75 {dimension_numbers = #tpu.dot_dimension_numbers<[1], [0], [0], [1], [0, 0, 1, 1], [], []>} : vector<2x128xbf16>, vector<128x128xbf16>, vector<2x128xf32> -> vector<2x128xf32>
    %79 = arith.addf %71, %78 : vector<2x128xf32>
    %c0_76 = arith.constant 0 : index
    %c0_77 = arith.constant 0 : index
    %80 = vector.load %arg10[%c0_76, %c0_77] : memref<1x128xf32, #tpu.memory_space<vmem>>, vector<1x128xf32>
    %81 = vector.broadcast %80 : vector<1x128xf32> to vector<2x128xf32>
    %82 = arith.addf %79, %81 : vector<2x128xf32>
    %cst_78 = arith.constant 0.000000e+00 : f32
    %83 = vector.broadcast %cst_78 : f32 to vector<2x128xf32>
    %84 = arith.maximumf %82, %83 : vector<2x128xf32>
    %c0_79 = arith.constant 0 : index
    %c0_80 = arith.constant 0 : index
    %c0_81 = arith.constant 0 : index
    %85 = vector.load %arg11[%c0_79, %c0_80, %c0_81] : memref<3x4x2xf32, #tpu.memory_space<vmem>>, vector<1x4x2xf32>
    %86 = vector.shape_cast %85 : vector<1x4x2xf32> to vector<4x2xf32>
    %cst_82 = arith.constant dense<0.000000e+00> : vector<4x128xf32>
    %87 = tpu.matmul %86, %84, %cst_82 {dimension_numbers = #tpu.dot_dimension_numbers<[1], [0], [0], [1], [0, 0, 1, 1], [], []>} : vector<4x2xf32>, vector<2x128xf32>, vector<4x128xf32> -> vector<4x128xf32>
    %88 = arith.truncf %87 : vector<4x128xf32> to vector<4x128xbf16>
    %c0_83 = arith.constant 0 : index
    %c0_84 = arith.constant 0 : index
    %c0_85 = arith.constant 0 : index
    %89 = vector.load %arg12[%c0_83, %c0_84, %c0_85] : memref<3x128x128xbf16, #tpu.memory_space<vmem>>, vector<1x128x128xbf16>
    %90 = vector.shape_cast %89 : vector<1x128x128xbf16> to vector<128x128xbf16>
    %cst_86 = arith.constant dense<0.000000e+00> : vector<4x128xf32>
    %91 = tpu.matmul %88, %90, %cst_86 {dimension_numbers = #tpu.dot_dimension_numbers<[1], [0], [0], [1], [0, 0, 1, 1], [], []>} : vector<4x128xbf16>, vector<128x128xbf16>, vector<4x128xf32> -> vector<4x128xf32>
    %c1_87 = arith.constant 1 : index
    %c0_88 = arith.constant 0 : index
    %c0_89 = arith.constant 0 : index
    %92 = vector.load %arg11[%c1_87, %c0_88, %c0_89] : memref<3x4x2xf32, #tpu.memory_space<vmem>>, vector<1x4x2xf32>
    %93 = vector.shape_cast %92 : vector<1x4x2xf32> to vector<4x2xf32>
    %cst_90 = arith.constant dense<0.000000e+00> : vector<4x128xf32>
    %94 = tpu.matmul %93, %84, %cst_90 {dimension_numbers = #tpu.dot_dimension_numbers<[1], [0], [0], [1], [0, 0, 1, 1], [], []>} : vector<4x2xf32>, vector<2x128xf32>, vector<4x128xf32> -> vector<4x128xf32>
    %95 = arith.truncf %94 : vector<4x128xf32> to vector<4x128xbf16>
    %c1_91 = arith.constant 1 : index
    %c0_92 = arith.constant 0 : index
    %c0_93 = arith.constant 0 : index
    %96 = vector.load %arg12[%c1_91, %c0_92, %c0_93] : memref<3x128x128xbf16, #tpu.memory_space<vmem>>, vector<1x128x128xbf16>
    %97 = vector.shape_cast %96 : vector<1x128x128xbf16> to vector<128x128xbf16>
    %cst_94 = arith.constant dense<0.000000e+00> : vector<4x128xf32>
    %98 = tpu.matmul %95, %97, %cst_94 {dimension_numbers = #tpu.dot_dimension_numbers<[1], [0], [0], [1], [0, 0, 1, 1], [], []>} : vector<4x128xbf16>, vector<128x128xbf16>, vector<4x128xf32> -> vector<4x128xf32>
    %99 = arith.addf %91, %98 : vector<4x128xf32>
    %c2_95 = arith.constant 2 : index
    %c0_96 = arith.constant 0 : index
    %c0_97 = arith.constant 0 : index
    %100 = vector.load %arg11[%c2_95, %c0_96, %c0_97] : memref<3x4x2xf32, #tpu.memory_space<vmem>>, vector<1x4x2xf32>
    %101 = vector.shape_cast %100 : vector<1x4x2xf32> to vector<4x2xf32>
    %cst_98 = arith.constant dense<0.000000e+00> : vector<4x128xf32>
    %102 = tpu.matmul %101, %84, %cst_98 {dimension_numbers = #tpu.dot_dimension_numbers<[1], [0], [0], [1], [0, 0, 1, 1], [], []>} : vector<4x2xf32>, vector<2x128xf32>, vector<4x128xf32> -> vector<4x128xf32>
    %103 = arith.truncf %102 : vector<4x128xf32> to vector<4x128xbf16>
    %c2_99 = arith.constant 2 : index
    %c0_100 = arith.constant 0 : index
    %c0_101 = arith.constant 0 : index
    %104 = vector.load %arg12[%c2_99, %c0_100, %c0_101] : memref<3x128x128xbf16, #tpu.memory_space<vmem>>, vector<1x128x128xbf16>
    %105 = vector.shape_cast %104 : vector<1x128x128xbf16> to vector<128x128xbf16>
    %cst_102 = arith.constant dense<0.000000e+00> : vector<4x128xf32>
    %106 = tpu.matmul %103, %105, %cst_102 {dimension_numbers = #tpu.dot_dimension_numbers<[1], [0], [0], [1], [0, 0, 1, 1], [], []>} : vector<4x128xbf16>, vector<128x128xbf16>, vector<4x128xf32> -> vector<4x128xf32>
    %107 = arith.addf %99, %106 : vector<4x128xf32>
    %c0_103 = arith.constant 0 : index
    %c0_104 = arith.constant 0 : index
    %108 = vector.load %arg13[%c0_103, %c0_104] : memref<1x128xf32, #tpu.memory_space<vmem>>, vector<1x128xf32>
    %109 = vector.broadcast %108 : vector<1x128xf32> to vector<4x128xf32>
    %110 = arith.addf %107, %109 : vector<4x128xf32>
    %cst_105 = arith.constant 0.000000e+00 : f32
    %111 = vector.broadcast %cst_105 : f32 to vector<4x128xf32>
    %112 = arith.maximumf %110, %111 : vector<4x128xf32>
    %c0_106 = arith.constant 0 : index
    %c0_107 = arith.constant 0 : index
    %c0_108 = arith.constant 0 : index
    %113 = vector.load %arg14[%c0_106, %c0_107, %c0_108] : memref<3x8x4xf32, #tpu.memory_space<vmem>>, vector<1x8x4xf32>
    %114 = vector.shape_cast %113 : vector<1x8x4xf32> to vector<8x4xf32>
    %cst_109 = arith.constant dense<0.000000e+00> : vector<8x128xf32>
    %115 = tpu.matmul %114, %112, %cst_109 {dimension_numbers = #tpu.dot_dimension_numbers<[1], [0], [0], [1], [0, 0, 1, 1], [], []>} : vector<8x4xf32>, vector<4x128xf32>, vector<8x128xf32> -> vector<8x128xf32>
    %116 = arith.truncf %115 : vector<8x128xf32> to vector<8x128xbf16>
    %c0_110 = arith.constant 0 : index
    %c0_111 = arith.constant 0 : index
    %c0_112 = arith.constant 0 : index
    %117 = vector.load %arg15[%c0_110, %c0_111, %c0_112] : memref<3x128x128xbf16, #tpu.memory_space<vmem>>, vector<1x128x128xbf16>
    %118 = vector.shape_cast %117 : vector<1x128x128xbf16> to vector<128x128xbf16>
    %cst_113 = arith.constant dense<0.000000e+00> : vector<8x128xf32>
    %119 = tpu.matmul %116, %118, %cst_113 {dimension_numbers = #tpu.dot_dimension_numbers<[1], [0], [0], [1], [0, 0, 1, 1], [], []>} : vector<8x128xbf16>, vector<128x128xbf16>, vector<8x128xf32> -> vector<8x128xf32>
    %c1_114 = arith.constant 1 : index
    %c0_115 = arith.constant 0 : index
    %c0_116 = arith.constant 0 : index
    %120 = vector.load %arg14[%c1_114, %c0_115, %c0_116] : memref<3x8x4xf32, #tpu.memory_space<vmem>>, vector<1x8x4xf32>
    %121 = vector.shape_cast %120 : vector<1x8x4xf32> to vector<8x4xf32>
    %cst_117 = arith.constant dense<0.000000e+00> : vector<8x128xf32>
    %122 = tpu.matmul %121, %112, %cst_117 {dimension_numbers = #tpu.dot_dimension_numbers<[1], [0], [0], [1], [0, 0, 1, 1], [], []>} : vector<8x4xf32>, vector<4x128xf32>, vector<8x128xf32> -> vector<8x128xf32>
    %123 = arith.truncf %122 : vector<8x128xf32> to vector<8x128xbf16>
    %c1_118 = arith.constant 1 : index
    %c0_119 = arith.constant 0 : index
    %c0_120 = arith.constant 0 : index
    %124 = vector.load %arg15[%c1_118, %c0_119, %c0_120] : memref<3x128x128xbf16, #tpu.memory_space<vmem>>, vector<1x128x128xbf16>
    %125 = vector.shape_cast %124 : vector<1x128x128xbf16> to vector<128x128xbf16>
    %cst_121 = arith.constant dense<0.000000e+00> : vector<8x128xf32>
    %126 = tpu.matmul %123, %125, %cst_121 {dimension_numbers = #tpu.dot_dimension_numbers<[1], [0], [0], [1], [0, 0, 1, 1], [], []>} : vector<8x128xbf16>, vector<128x128xbf16>, vector<8x128xf32> -> vector<8x128xf32>
    %127 = arith.addf %119, %126 : vector<8x128xf32>
    %c2_122 = arith.constant 2 : index
    %c0_123 = arith.constant 0 : index
    %c0_124 = arith.constant 0 : index
    %128 = vector.load %arg14[%c2_122, %c0_123, %c0_124] : memref<3x8x4xf32, #tpu.memory_space<vmem>>, vector<1x8x4xf32>
    %129 = vector.shape_cast %128 : vector<1x8x4xf32> to vector<8x4xf32>
    %cst_125 = arith.constant dense<0.000000e+00> : vector<8x128xf32>
    %130 = tpu.matmul %129, %112, %cst_125 {dimension_numbers = #tpu.dot_dimension_numbers<[1], [0], [0], [1], [0, 0, 1, 1], [], []>} : vector<8x4xf32>, vector<4x128xf32>, vector<8x128xf32> -> vector<8x128xf32>
    %131 = arith.truncf %130 : vector<8x128xf32> to vector<8x128xbf16>
    %c2_126 = arith.constant 2 : index
    %c0_127 = arith.constant 0 : index
    %c0_128 = arith.constant 0 : index
    %132 = vector.load %arg15[%c2_126, %c0_127, %c0_128] : memref<3x128x128xbf16, #tpu.memory_space<vmem>>, vector<1x128x128xbf16>
    %133 = vector.shape_cast %132 : vector<1x128x128xbf16> to vector<128x128xbf16>
    %cst_129 = arith.constant dense<0.000000e+00> : vector<8x128xf32>
    %134 = tpu.matmul %131, %133, %cst_129 {dimension_numbers = #tpu.dot_dimension_numbers<[1], [0], [0], [1], [0, 0, 1, 1], [], []>} : vector<8x128xbf16>, vector<128x128xbf16>, vector<8x128xf32> -> vector<8x128xf32>
    %135 = arith.addf %127, %134 : vector<8x128xf32>
    %c0_130 = arith.constant 0 : index
    %c0_131 = arith.constant 0 : index
    %136 = vector.load %arg16[%c0_130, %c0_131] : memref<1x128xf32, #tpu.memory_space<vmem>>, vector<1x128xf32>
    %137 = vector.broadcast %136 : vector<1x128xf32> to vector<8x128xf32>
    %138 = arith.addf %135, %137 : vector<8x128xf32>
    %cst_132 = arith.constant 0.000000e+00 : f32
    %139 = vector.broadcast %cst_132 : f32 to vector<8x128xf32>
    %140 = arith.maximumf %138, %139 : vector<8x128xf32>
    %c0_133 = arith.constant 0 : index
    %c0_134 = arith.constant 0 : index
    %c0_135 = arith.constant 0 : index
    %141 = vector.load %arg17[%c0_133, %c0_134, %c0_135] : memref<3x16x8xf32, #tpu.memory_space<vmem>>, vector<1x16x8xf32>
    %142 = vector.shape_cast %141 : vector<1x16x8xf32> to vector<16x8xf32>
    %cst_136 = arith.constant dense<0.000000e+00> : vector<16x128xf32>
    %143 = tpu.matmul %142, %140, %cst_136 {dimension_numbers = #tpu.dot_dimension_numbers<[1], [0], [0], [1], [0, 0, 1, 1], [], []>} : vector<16x8xf32>, vector<8x128xf32>, vector<16x128xf32> -> vector<16x128xf32>
    %144 = arith.truncf %143 : vector<16x128xf32> to vector<16x128xbf16>
    %c0_137 = arith.constant 0 : index
    %c0_138 = arith.constant 0 : index
    %c0_139 = arith.constant 0 : index
    %145 = vector.load %arg18[%c0_137, %c0_138, %c0_139] : memref<3x128x16xbf16, #tpu.memory_space<vmem>>, vector<1x128x16xbf16>
    %146 = vector.shape_cast %145 : vector<1x128x16xbf16> to vector<128x16xbf16>
    %cst_140 = arith.constant dense<0.000000e+00> : vector<16x16xf32>
    %147 = tpu.matmul %144, %146, %cst_140 {dimension_numbers = #tpu.dot_dimension_numbers<[1], [0], [0], [1], [0, 0, 1, 1], [], []>} : vector<16x128xbf16>, vector<128x16xbf16>, vector<16x16xf32> -> vector<16x16xf32>
    %c1_141 = arith.constant 1 : index
    %c0_142 = arith.constant 0 : index
    %c0_143 = arith.constant 0 : index
    %148 = vector.load %arg17[%c1_141, %c0_142, %c0_143] : memref<3x16x8xf32, #tpu.memory_space<vmem>>, vector<1x16x8xf32>
    %149 = vector.shape_cast %148 : vector<1x16x8xf32> to vector<16x8xf32>
    %cst_144 = arith.constant dense<0.000000e+00> : vector<16x128xf32>
    %150 = tpu.matmul %149, %140, %cst_144 {dimension_numbers = #tpu.dot_dimension_numbers<[1], [0], [0], [1], [0, 0, 1, 1], [], []>} : vector<16x8xf32>, vector<8x128xf32>, vector<16x128xf32> -> vector<16x128xf32>
    %151 = arith.truncf %150 : vector<16x128xf32> to vector<16x128xbf16>
    %c1_145 = arith.constant 1 : index
    %c0_146 = arith.constant 0 : index
    %c0_147 = arith.constant 0 : index
    %152 = vector.load %arg18[%c1_145, %c0_146, %c0_147] : memref<3x128x16xbf16, #tpu.memory_space<vmem>>, vector<1x128x16xbf16>
    %153 = vector.shape_cast %152 : vector<1x128x16xbf16> to vector<128x16xbf16>
    %cst_148 = arith.constant dense<0.000000e+00> : vector<16x16xf32>
    %154 = tpu.matmul %151, %153, %cst_148 {dimension_numbers = #tpu.dot_dimension_numbers<[1], [0], [0], [1], [0, 0, 1, 1], [], []>} : vector<16x128xbf16>, vector<128x16xbf16>, vector<16x16xf32> -> vector<16x16xf32>
    %155 = arith.addf %147, %154 : vector<16x16xf32>
    %c2_149 = arith.constant 2 : index
    %c0_150 = arith.constant 0 : index
    %c0_151 = arith.constant 0 : index
    %156 = vector.load %arg17[%c2_149, %c0_150, %c0_151] : memref<3x16x8xf32, #tpu.memory_space<vmem>>, vector<1x16x8xf32>
    %157 = vector.shape_cast %156 : vector<1x16x8xf32> to vector<16x8xf32>
    %cst_152 = arith.constant dense<0.000000e+00> : vector<16x128xf32>
    %158 = tpu.matmul %157, %140, %cst_152 {dimension_numbers = #tpu.dot_dimension_numbers<[1], [0], [0], [1], [0, 0, 1, 1], [], []>} : vector<16x8xf32>, vector<8x128xf32>, vector<16x128xf32> -> vector<16x128xf32>
    %159 = arith.truncf %158 : vector<16x128xf32> to vector<16x128xbf16>
    %c2_153 = arith.constant 2 : index
    %c0_154 = arith.constant 0 : index
    %c0_155 = arith.constant 0 : index
    %160 = vector.load %arg18[%c2_153, %c0_154, %c0_155] : memref<3x128x16xbf16, #tpu.memory_space<vmem>>, vector<1x128x16xbf16>
    %161 = vector.shape_cast %160 : vector<1x128x16xbf16> to vector<128x16xbf16>
    %cst_156 = arith.constant dense<0.000000e+00> : vector<16x16xf32>
    %162 = tpu.matmul %159, %161, %cst_156 {dimension_numbers = #tpu.dot_dimension_numbers<[1], [0], [0], [1], [0, 0, 1, 1], [], []>} : vector<16x128xbf16>, vector<128x16xbf16>, vector<16x16xf32> -> vector<16x16xf32>
    %163 = arith.addf %155, %162 : vector<16x16xf32>
    %c0_157 = arith.constant 0 : index
    %c0_158 = arith.constant 0 : index
    %164 = vector.load %arg19[%c0_157, %c0_158] : memref<1x16xf32, #tpu.memory_space<vmem>>, vector<1x16xf32>
    %165 = vector.broadcast %164 : vector<1x16xf32> to vector<16x16xf32>
    %166 = arith.addf %163, %165 : vector<16x16xf32>
    %cst_159 = arith.constant 0.000000e+00 : f32
    %167 = vector.broadcast %cst_159 : f32 to vector<16x16xf32>
    %168 = arith.subf %167, %166 : vector<16x16xf32>
    %169 = math.exp %168 : vector<16x16xf32>
    %cst_160 = arith.constant 1.000000e+00 : f32
    %170 = vector.broadcast %cst_160 : f32 to vector<16x16xf32>
    %171 = arith.addf %170, %169 : vector<16x16xf32>
    %cst_161 = arith.constant 1.000000e+00 : f32
    %172 = vector.broadcast %cst_161 : f32 to vector<16x16xf32>
    %173 = arith.divf %172, %171 : vector<16x16xf32>
    %c0_162 = arith.constant 0 : index
    %c0_163 = arith.constant 0 : index
    %174 = vector.load %arg20[%c0_162, %c0_163] : memref<16x16xf32, #tpu.memory_space<vmem>>, vector<16x16xf32>
    tpu.vector_store %arg20[%c0_162, %c0_163], %173 {strides = array<i32>} : memref<16x16xf32, #tpu.memory_space<vmem>>, vector<16x16xf32>,
    return
  }
  func.func @transform_0(%arg0: i32) -> (i32, i32) {
    %c0_i32 = arith.constant 0 : i32
    %c0_i32_0 = arith.constant 0 : i32
    return %arg0, %c0_i32 : i32, i32
  }
  func.func @transform_1(%arg0: i32) -> (i32, i32, i32) {
    %c0_i32 = arith.constant 0 : i32
    %c0_i32_0 = arith.constant 0 : i32
    %c0_i32_1 = arith.constant 0 : i32
    %c0_i32_2 = arith.constant 0 : i32
    return %c0_i32, %c0_i32_0, %c0_i32_1 : i32, i32, i32
  }
  func.func @transform_2(%arg0: i32) -> (i32, i32, i32) {
    %c0_i32 = arith.constant 0 : i32
    %c0_i32_0 = arith.constant 0 : i32
    %c0_i32_1 = arith.constant 0 : i32
    %c0_i32_2 = arith.constant 0 : i32
    return %c0_i32, %c0_i32_0, %c0_i32_1 : i32, i32, i32
  }
  func.func @transform_3(%arg0: i32) -> (i32, i32) {
    %c0_i32 = arith.constant 0 : i32
    %c0_i32_0 = arith.constant 0 : i32
    %c0_i32_1 = arith.constant 0 : i32
    return %c0_i32, %c0_i32_0 : i32, i32
  }
  func.func @transform_4(%arg0: i32) -> (i32, i32, i32) {
    %c0_i32 = arith.constant 0 : i32
    %c0_i32_0 = arith.constant 0 : i32
    %c0_i32_1 = arith.constant 0 : i32
    %c0_i32_2 = arith.constant 0 : i32
    return %c0_i32, %c0_i32_0, %c0_i32_1 : i32, i32, i32
  }
  func.func @transform_5(%arg0: i32) -> (i32, i32, i32) {
    %c0_i32 = arith.constant 0 : i32
    %c0_i32_0 = arith.constant 0 : i32
    %c0_i32_1 = arith.constant 0 : i32
    %c0_i32_2 = arith.constant 0 : i32
    return %c0_i32, %c0_i32_0, %c0_i32_1 : i32, i32, i32
  }
  func.func @transform_6(%arg0: i32) -> (i32, i32) {
    %c0_i32 = arith.constant 0 : i32
    %c0_i32_0 = arith.constant 0 : i32
    %c0_i32_1 = arith.constant 0 : i32
    return %c0_i32, %c0_i32_0 : i32, i32
  }
  func.func @transform_7(%arg0: i32) -> (i32, i32, i32) {
    %c0_i32 = arith.constant 0 : i32
    %c0_i32_0 = arith.constant 0 : i32
    %c0_i32_1 = arith.constant 0 : i32
    %c0_i32_2 = arith.constant 0 : i32
    return %c0_i32, %c0_i32_0, %c0_i32_1 : i32, i32, i32
  }
  func.func @transform_8(%arg0: i32) -> (i32, i32, i32) {
    %c0_i32 = arith.constant 0 : i32
    %c0_i32_0 = arith.constant 0 : i32
    %c0_i32_1 = arith.constant 0 : i32
    %c0_i32_2 = arith.constant 0 : i32
    return %c0_i32, %c0_i32_0, %c0_i32_1 : i32, i32, i32
  }
  func.func @transform_9(%arg0: i32) -> (i32, i32) {
    %c0_i32 = arith.constant 0 : i32
    %c0_i32_0 = arith.constant 0 : i32
    %c0_i32_1 = arith.constant 0 : i32
    return %c0_i32, %c0_i32_0 : i32, i32
  }
  func.func @transform_10(%arg0: i32) -> (i32, i32, i32) {
    %c0_i32 = arith.constant 0 : i32
    %c0_i32_0 = arith.constant 0 : i32
    %c0_i32_1 = arith.constant 0 : i32
    %c0_i32_2 = arith.constant 0 : i32
    return %c0_i32, %c0_i32_0, %c0_i32_1 : i32, i32, i32
  }
  func.func @transform_11(%arg0: i32) -> (i32, i32, i32) {
    %c0_i32 = arith.constant 0 : i32
    %c0_i32_0 = arith.constant 0 : i32
    %c0_i32_1 = arith.constant 0 : i32
    %c0_i32_2 = arith.constant 0 : i32
    return %c0_i32, %c0_i32_0, %c0_i32_1 : i32, i32, i32
  }
  func.func @transform_12(%arg0: i32) -> (i32, i32) {
    %c0_i32 = arith.constant 0 : i32
    %c0_i32_0 = arith.constant 0 : i32
    %c0_i32_1 = arith.constant 0 : i32
    return %c0_i32, %c0_i32_0 : i32, i32
  }
  func.func @transform_13(%arg0: i32) -> (i32, i32, i32) {
    %c0_i32 = arith.constant 0 : i32
    %c0_i32_0 = arith.constant 0 : i32
    %c0_i32_1 = arith.constant 0 : i32
    %c0_i32_2 = arith.constant 0 : i32
    return %c0_i32, %c0_i32_0, %c0_i32_1 : i32, i32, i32
  }
  func.func @transform_14(%arg0: i32) -> (i32, i32, i32) {
    %c0_i32 = arith.constant 0 : i32
    %c0_i32_0 = arith.constant 0 : i32
    %c0_i32_1 = arith.constant 0 : i32
    %c0_i32_2 = arith.constant 0 : i32
    return %c0_i32, %c0_i32_0, %c0_i32_1 : i32, i32, i32
  }
  func.func @transform_15(%arg0: i32) -> (i32, i32) {
    %c0_i32 = arith.constant 0 : i32
    %c0_i32_0 = arith.constant 0 : i32
    %c0_i32_1 = arith.constant 0 : i32
    return %c0_i32, %c0_i32_0 : i32, i32
  }
  func.func @transform_16(%arg0: i32) -> (i32, i32, i32) {
    %c0_i32 = arith.constant 0 : i32
    %c0_i32_0 = arith.constant 0 : i32
    %c0_i32_1 = arith.constant 0 : i32
    %c0_i32_2 = arith.constant 0 : i32
    return %c0_i32, %c0_i32_0, %c0_i32_1 : i32, i32, i32
  }
  func.func @transform_17(%arg0: i32) -> (i32, i32, i32) {
    %c0_i32 = arith.constant 0 : i32
    %c0_i32_0 = arith.constant 0 : i32
    %c0_i32_1 = arith.constant 0 : i32
    %c0_i32_2 = arith.constant 0 : i32
    return %c0_i32, %c0_i32_0, %c0_i32_1 : i32, i32, i32
  }
  func.func @transform_18(%arg0: i32) -> (i32, i32) {
    %c0_i32 = arith.constant 0 : i32
    %c0_i32_0 = arith.constant 0 : i32
    %c0_i32_1 = arith.constant 0 : i32
    return %c0_i32, %c0_i32_0 : i32, i32
  }
  func.func @transform_19(%arg0: i32) -> (i32, i32) {
    %c0_i32 = arith.constant 0 : i32
    %c0_i32_0 = arith.constant 0 : i32
    return %arg0, %c0_i32 : i32, i32
  }
}

</mosaic_0001>

<llo_original>
// kernel: tile.33
$region0: #{tile.33}
  #allocation0 [shape = 's32[1]{0}', space=sflag, size = 0x4, scoped, tag = 'scoped memory for tile.33']
  %s0 = inlined_call_operand.vmem [shape: f32[16], index: 0, kind: input, shape index: {}]
  %s1 = inlined_call_operand.vmem [shape: f32[8,16], index: 1, kind: output, shape index: {}]
  // Predicated region
  $region2: #{tile.33} parent=0 // pred_check
    _
  $region3: #{tile.33} parent=0 // pred_check_branch
    %3 = sbr.rel (0) target = $region5
  $region4: #{tile.33} parent=0 // pred_region
    _
  $region5: #{tile.33} parent=0 // pred_fallthru
    _
  %v4 = vld [vmem:[%s0] ss:$0 sm:$0xff]
  %5 = vst [vmem:[%s1] sm:$0xff] %v4

// kernel: tile.38
$region0: #{tile.38}
  #allocation0 [shape = 's32[1]{0}', space=sflag, size = 0x4, scoped, tag = 'scoped memory for tile.38']
  %s0 = inlined_call_operand.vmem [shape: f32[32], index: 0, kind: input, shape index: {}]
  %s1 = inlined_call_operand.vmem [shape: f32[4,32], index: 1, kind: output, shape index: {}]
  // Predicated region
  $region2: #{tile.38} parent=0 // pred_check
    _
  $region3: #{tile.38} parent=0 // pred_check_branch
    %3 = sbr.rel (0) target = $region5
  $region4: #{tile.38} parent=0 // pred_region
    _
  $region5: #{tile.38} parent=0 // pred_fallthru
    _
  %v4 = vld [vmem:[%s0] ss:$0 sm:$0xff]
  %5 = vst [vmem:[%s1] sm:$0xf] %v4

// kernel: tile.34
$region0: #{tile.34}
  %s0 = inlined_call_operand.vmem [shape: f32[8,16], index: 0, kind: input, shape index: {}]
  %s1 = inlined_call_operand.vmem [shape: f32[1,128], index: 1, kind: output, shape index: {}]
  $region1: #{tile.34} parent=0
    #allocation0 [shape = 'u8[4096]{0}', space=vmem, size = 0x1000, scoped, tag = 'scoped mem for output reshape']
    %v2 = vld [vmem:[%s0] sm:$0x1]
    %vm3 = vcmask 130048
    %4 = vst.msk [vmem:[#allocation0] sm:$0x1] %vm3, %v2
    %s5 = scalar_lea.vmem %s0, 7
    %v6 = vld [vmem:[%s5] sm:$0x1]
    %7 = vrot.lane.b32.xlu0 %v6, 112
    %v8 = vpop.permute.xlu0 %7
    %vm9 = vcmask 1048448
    %10 = vst.msk [vmem:[#allocation0] sm:$0x1] %vm9, %v8
    %s11 = scalar_lea.vmem %s0, 6
    %v12 = vld [vmem:[%s11] sm:$0x1]
    %13 = vrot.lane.b32.xlu0 %v12, 96
    %v14 = vpop.permute.xlu0 %13
    %vm15 = vcmask 917248
    %16 = vst.msk [vmem:[#allocation0] sm:$0x1] %vm15, %v14
    %s17 = scalar_lea.vmem %s0, 5
    %v18 = vld [vmem:[%s17] sm:$0x1]
    %19 = vrot.lane.b32.xlu0 %v18, 80
    %v20 = vpop.permute.xlu0 %19
    %vm21 = vcmask 786048
    %22 = vst.msk [vmem:[#allocation0] sm:$0x1] %vm21, %v20
    %s23 = scalar_lea.vmem %s0, 4
    %v24 = vld [vmem:[%s23] sm:$0x1]
    %25 = vrot.lane.b32.xlu0 %v24, 64
    %v26 = vpop.permute.xlu0 %25
    %vm27 = vcmask 654848
    %28 = vst.msk [vmem:[#allocation0] sm:$0x1] %vm27, %v26
    %s29 = scalar_lea.vmem %s0, 3
    %v30 = vld [vmem:[%s29] sm:$0x1]
    %31 = vrot.lane.b32.xlu0 %v30, 48
    %v32 = vpop.permute.xlu0 %31
    %vm33 = vcmask 523648
    %34 = vst.msk [vmem:[#allocation0] sm:$0x1] %vm33, %v32
    %s35 = scalar_lea.vmem %s0, 2
    %v36 = vld [vmem:[%s35] sm:$0x1]
    %37 = vrot.lane.b32.xlu0 %v36, 32
    %v38 = vpop.permute.xlu0 %37
    %vm39 = vcmask 392448
    %40 = vst.msk [vmem:[#allocation0] sm:$0x1] %vm39, %v38
    %s41 = scalar_lea.vmem %s0, 1
    %v42 = vld [vmem:[%s41] sm:$0x1]
    %43 = vrot.lane.b32.xlu0 %v42, 16
    %v44 = vpop.permute.xlu0 %43
    %vm45 = vcmask 261248
    %46 = vst.msk [vmem:[#allocation0] sm:$0x1] %vm45, %v44
    %s48 = ssub.s32 2, 1
    %v49 = vld [vmem:[#allocation0] sm:%s48]
    %s51 = ssub.s32 2, 1
    %52 = vst [vmem:[%s1] sm:%s51] %v49

// kernel: tile.39
$region0: #{tile.39}
  %s0 = inlined_call_operand.vmem [shape: f32[4,32], index: 0, kind: input, shape index: {}]
  %s1 = inlined_call_operand.vmem [shape: f32[1,128], index: 1, kind: output, shape index: {}]
  $region1: #{tile.39} parent=0
    #allocation0 [shape = 'u8[4096]{0}', space=vmem, size = 0x1000, scoped, tag = 'scoped mem for output reshape']
    #allocation1 [shape = 'u8[4096]{0}', space=vmem, size = 0x1000, scoped, tag = 'scoped mem for input reshape']
    %s3 = ssub.s32 16, 1
    %v4 = vld [vmem:[%s0] sm:%s3]
    %5 = vst [vmem:[#allocation1] sm:%s3] %v4
    %v6 = vld [vmem:[#allocation1] sm:$0x1]
    %vm7 = vcmask 261120
    %8 = vst.msk [vmem:[#allocation0] sm:$0x1] %vm7, %v6
    %s9 = scalar_lea.vmem [#allocation1], 3
    %v10 = vld [vmem:[%s9] sm:$0x1]
    %11 = vrot.lane.b32.xlu0 %v10, 96
    %v12 = vpop.permute.xlu0 %11
    %vm13 = vcmask 1048320
    %14 = vst.msk [vmem:[#allocation0] sm:$0x1] %vm13, %v12
    %s15 = scalar_lea.vmem [#allocation1], 2
    %v16 = vld [vmem:[%s15] sm:$0x1]
    %17 = vrot.lane.b32.xlu0 %v16, 64
    %v18 = vpop.permute.xlu0 %17
    %vm19 = vcmask 785920
    %20 = vst.msk [vmem:[#allocation0] sm:$0x1] %vm19, %v18
    %s21 = scalar_lea.vmem [#allocation1], 1
    %v22 = vld [vmem:[%s21] sm:$0x1]
    %23 = vrot.lane.b32.xlu0 %v22, 32
    %v24 = vpop.permute.xlu0 %23
    %vm25 = vcmask 523520
    %26 = vst.msk [vmem:[#allocation0] sm:$0x1] %vm25, %v24
    %s28 = ssub.s32 2, 1
    %v29 = vld [vmem:[#allocation0] sm:%s28]
    %s31 = ssub.s32 2, 1
    %32 = vst [vmem:[%s1] sm:%s31] %v29

// kernel: tile.43
$region0: #{tile.43}
  #allocation0 [shape = 's32[1]{0}', space=sflag, size = 0x4, scoped, tag = 'scoped memory for tile.43']
  %s0 = inlined_call_operand.vmem [shape: f32[64], index: 0, kind: input, shape index: {}]
  %s1 = inlined_call_operand.vmem [shape: f32[2,64], index: 1, kind: output, shape index: {}]
  // Predicated region
  $region2: #{tile.43} parent=0 // pred_check
    _
  $region3: #{tile.43} parent=0 // pred_check_branch
    %3 = sbr.rel (0) target = $region5
  $region4: #{tile.43} parent=0 // pred_region
    _
  $region5: #{tile.43} parent=0 // pred_fallthru
    _
  %v4 = vld [vmem:[%s0] ss:$0 sm:$0xff]
  %5 = vst [vmem:[%s1] sm:$0x3] %v4

// kernel: tile.44
$region0: #{tile.44}
  %s0 = inlined_call_operand.vmem [shape: f32[2,64], index: 0, kind: input, shape index: {}]
  %s1 = inlined_call_operand.vmem [shape: f32[1,128], index: 1, kind: output, shape index: {}]
  $region1: #{tile.44} parent=0
    #allocation0 [shape = 'u8[4096]{0}', space=vmem, size = 0x1000, scoped, tag = 'scoped mem for output reshape']
    #allocation1 [shape = 'u8[4096]{0}', space=vmem, size = 0x1000, scoped, tag = 'scoped mem for input reshape']
    %s3 = ssub.s32 4, 1
    %v4 = vld [vmem:[%s0] sm:%s3]
    %5 = vst [vmem:[#allocation1] sm:%s3] %v4
    %v6 = vld [vmem:[#allocation1] sm:$0x1]
    %vm7 = vcmask 523264
    %8 = vst.msk [vmem:[#allocation0] sm:$0x1] %vm7, %v6
    %s9 = scalar_lea.vmem [#allocation1], 1
    %v10 = vld [vmem:[%s9] sm:$0x1]
    %11 = vrot.lane.b32.xlu0 %v10, 64
    %v12 = vpop.permute.xlu0 %11
    %vm13 = vcmask 1048064
    %14 = vst.msk [vmem:[#allocation0] sm:$0x1] %vm13, %v12
    %s16 = ssub.s32 2, 1
    %v17 = vld [vmem:[#allocation0] sm:%s16]
    %s19 = ssub.s32 2, 1
    %20 = vst [vmem:[%s1] sm:%s19] %v17

// kernel: autoencoder_forward.1
$region0: #{autoencoder_forward.1}
  #allocation0 [shape = 'u32[]', space=smem, size = 0x4, offset = 0x4, fixed_abs, tag = 'smem constant byte address 0x4 - core index']
  #allocation1 [shape = 'u32[72,128]{1,0:T(1,128)}', space=vmem, size = 0x9000, scoped, tag = 'internal scratch']
  %s0 = inlined_call_operand.vmem [shape: f32[32,16], index: 0, kind: input, shape index: {}]
  %s1 = inlined_call_operand.vmem [shape: f32[3,8,16], index: 1, kind: input, shape index: {}]
  %s2 = inlined_call_operand.vmem [shape: bf16[3,16,128], index: 2, kind: input, shape index: {}]
  %s3 = inlined_call_operand.vmem [shape: f32[1,128], index: 3, kind: input, shape index: {}]
  %s4 = inlined_call_operand.vmem [shape: f32[3,4,8], index: 4, kind: input, shape index: {}]
  %s5 = inlined_call_operand.vmem [shape: bf16[3,128,128], index: 5, kind: input, shape index: {}]
  %s6 = inlined_call_operand.vmem [shape: f32[1,128], index: 6, kind: input, shape index: {}]
  %s7 = inlined_call_operand.vmem [shape: f32[3,2,4], index: 7, kind: input, shape index: {}]
  %s8 = inlined_call_operand.vmem [shape: bf16[3,128,128], index: 8, kind: input, shape index: {}]
  %s9 = inlined_call_operand.vmem [shape: f32[1,128], index: 9, kind: input, shape index: {}]
  %s10 = inlined_call_operand.vmem [shape: f32[3,4,2], index: 10, kind: input, shape index: {}]
  %s11 = inlined_call_operand.vmem [shape: bf16[3,128,128], index: 11, kind: input, shape index: {}]
  %s12 = inlined_call_operand.vmem [shape: f32[1,128], index: 12, kind: input, shape index: {}]
  %s13 = inlined_call_operand.vmem [shape: f32[3,8,4], index: 13, kind: input, shape index: {}]
  %s14 = inlined_call_operand.vmem [shape: bf16[3,128,128], index: 14, kind: input, shape index: {}]
  %s15 = inlined_call_operand.vmem [shape: f32[1,128], index: 15, kind: input, shape index: {}]
  %s16 = inlined_call_operand.vmem [shape: f32[3,16,8], index: 16, kind: input, shape index: {}]
  %s17 = inlined_call_operand.vmem [shape: bf16[3,128,16], index: 17, kind: input, shape index: {}]
  %s18 = inlined_call_operand.vmem [shape: f32[1,16], index: 18, kind: input, shape index: {}]
  %s19 = inlined_call_operand.hbm [shape: f32[32,16], index: 19, kind: output, shape index: {}]
  %s20 = sld [smem:[#allocation0]]
  $region109: #{autoencoder_forward.1} parent=0
    _
  %s22 = ssub.s32 1, %s20
  %s23 = scalar_select 0, %s22, %s20
  $region1: #{autoencoder_forward.1} parent=0
    #allocation2 [shape = 'u8[16384]{0}', space=vmem, size = 0x4000, scoped, tag = 'output window, operand 0']
    #allocation3 [shape = 's32[2]{0}', space=sflag, size = 0x8, scoped, tag = 'scoped memory for autoencoder_forward.1']
    %24 = vsyncpa [#allocation3], 0
    %s25 = scalar_lea.sflag [#allocation3], 1
    %26 = vsyncpa %s25, 0
    loop: start=0, step=1, limit=4
    $region2: #{autoencoder_forward.1} parent=1 // loop_pre_header
      _
    $region3: #{autoencoder_forward.1} parent=1 // loop_header
      %s28 = sphi 0, %s32
      %p29 = scmp.ge.s32.totalorder %s28, 4
      %s38 = sphi 0, %s40
      %s41 = sphi 0, %s38
      %s42 = sphi 0, %s41
      %s58 = sphi 0, %s42
      %s62 = sphi 0, %s62
      %s64 = sphi 0, %s62
      %s65 = sphi 0, %s64
      %s79 = sphi 0, %s65
      %s83 = sphi 0, %s83
      %s85 = sphi 0, %s83
      %s86 = sphi 0, %s85
      %s100 = sphi 0, %s86
      %s104 = sphi 0, %s104
      %s106 = sphi 0, %s104
      %s107 = sphi 0, %s106
      %s121 = sphi 0, %s107
      %s125 = sphi 0, %s125
      %s127 = sphi 0, %s125
      %s128 = sphi 0, %s127
      %s142 = sphi 0, %s128
      %s146 = sphi 0, %s146
      %s148 = sphi 0, %s146
      %s149 = sphi 0, %s148
      %s163 = sphi 0, %s149
      %s167 = sphi 0, %s167
      %s169 = sphi 0, %s167
      %s170 = sphi 0, %s169
      %s184 = sphi 0, %s170
      %s188 = sphi 0, %s188
      %s190 = sphi 0, %s188
      %s191 = sphi 0, %s190
      %s205 = sphi 0, %s191
      %s209 = sphi 0, %s209
      %s211 = sphi 0, %s209
      %s212 = sphi 0, %s211
      %s226 = sphi 0, %s212
      %s230 = sphi 0, %s230
      %s232 = sphi 0, %s230
      %s233 = sphi 0, %s232
      %s247 = sphi 0, %s233
      %s251 = sphi 0, %s251
      %s253 = sphi 0, %s251
      %s254 = sphi 0, %s253
      %s268 = sphi 0, %s254
      %s272 = sphi 0, %s272
      %s274 = sphi 0, %s272
      %s275 = sphi 0, %s274
      %s289 = sphi 0, %s275
      %s293 = sphi 0, %s293
      %s295 = sphi 0, %s293
      %s296 = sphi 0, %s295
      %s310 = sphi 0, %s296
      %s314 = sphi 0, %s314
      %s316 = sphi 0, %s314
      %s317 = sphi 0, %s316
      %s331 = sphi 0, %s317
      %s335 = sphi 0, %s335
      %s337 = sphi 0, %s335
      %s338 = sphi 0, %s337
      %s352 = sphi 0, %s338
      %s356 = sphi 0, %s356
      %s358 = sphi 0, %s356
      %s359 = sphi 0, %s358
      %s373 = sphi 0, %s359
      %s377 = sphi 0, %s377
      %s379 = sphi 0, %s377
      %s380 = sphi 0, %s379
      %s394 = sphi 0, %s380
      %s398 = sphi 0, %s398
      %s400 = sphi 0, %s398
      %s401 = sphi 0, %s400
      %s415 = sphi 0, %s401
      %s419 = sphi 0, %s419
      %s421 = sphi 0, %s419
      %s422 = sphi 0, %s421
      %s436 = sphi 0, %s422
      %s442 = sphi 0, %s444
      %s445 = sphi 0, %s442
      %s446 = sphi 0, %s445
      %s462 = sphi 0, %s446
    $region4: #{autoencoder_forward.1} parent=1 // loop_header_branch
      %31 = sbr.rel (%p29) target = $region8
    $region5: #{autoencoder_forward.1} parent=1 // loop_body
      %s33 = ssub.s32 %s28, 1
      %s34 = ssub.s32 %s28, 2
      %s35 = sadd.s32 %s28, 1
      %s36 = ssub.s32 %s28, %s35
      %p37 = scmp.eq.s32.totalorder %s36, 0
      %s39 = sadd.s32 %s38, 1
      %s40 = scalar_select %p37, %s38, %s39
      %p43 = pneg %p37
      %p44 = scmp.eq.s32.totalorder %s28, 1
      %p45 = por %p43, %p44
      %p46 = scmp.ne.s32.totalorder %s38, %s41
      %p47 = scmp.eq.s32.totalorder %s28, 0
      %p48 = por %p46, %p47
      %p49 = scmp.ne.s32.totalorder %s38, %s41
      %p50 = scmp.eq.s32.totalorder %s33, 1
      %p51 = por %p49, %p50
      %p52 = scmp.ne.s32.totalorder %s41, %s42
      %p53 = scmp.eq.s32.totalorder %s33, 0
      %p54 = por %p52, %p53
      %p55 = scmp.ne.s32.totalorder %s41, %s42
      %p56 = scmp.eq.s32.totalorder %s34, 1
      %p57 = por %p55, %p56
      %p59 = scmp.ne.s32.totalorder %s42, %s58
      %p60 = scmp.eq.s32.totalorder %s34, 0
      %p61 = por %p59, %p60
      %s63 = sadd.s32 %s62, 1
      %p66 = scmp.eq.s32.totalorder %s28, 1
      %p67 = scmp.ne.s32.totalorder %s62, %s64
      %p68 = scmp.eq.s32.totalorder %s28, 0
      %p69 = por %p67, %p68
      %p70 = scmp.ne.s32.totalorder %s62, %s64
      %p71 = scmp.eq.s32.totalorder %s33, 1
      %p72 = por %p70, %p71
      %p73 = scmp.ne.s32.totalorder %s64, %s65
      %p74 = scmp.eq.s32.totalorder %s33, 0
      %p75 = por %p73, %p74
      %p76 = scmp.ne.s32.totalorder %s64, %s65
      %p77 = scmp.eq.s32.totalorder %s34, 1
      %p78 = por %p76, %p77
      %p80 = scmp.ne.s32.totalorder %s65, %s79
      %p81 = scmp.eq.s32.totalorder %s34, 0
      %p82 = por %p80, %p81
      %s84 = sadd.s32 %s83, 1
      %p87 = scmp.eq.s32.totalorder %s28, 1
      %p88 = scmp.ne.s32.totalorder %s83, %s85
      %p89 = scmp.eq.s32.totalorder %s28, 0
      %p90 = por %p88, %p89
      %p91 = scmp.ne.s32.totalorder %s83, %s85
      %p92 = scmp.eq.s32.totalorder %s33, 1
      %p93 = por %p91, %p92
      %p94 = scmp.ne.s32.totalorder %s85, %s86
      %p95 = scmp.eq.s32.totalorder %s33, 0
      %p96 = por %p94, %p95
      %p97 = scmp.ne.s32.totalorder %s85, %s86
      %p98 = scmp.eq.s32.totalorder %s34, 1
      %p99 = por %p97, %p98
      %p101 = scmp.ne.s32.totalorder %s86, %s100
      %p102 = scmp.eq.s32.totalorder %s34, 0
      %p103 = por %p101, %p102
      %s105 = sadd.s32 %s104, 1
      %p108 = scmp.eq.s32.totalorder %s28, 1
      %p109 = scmp.ne.s32.totalorder %s104, %s106
      %p110 = scmp.eq.s32.totalorder %s28, 0
      %p111 = por %p109, %p110
      %p112 = scmp.ne.s32.totalorder %s104, %s106
      %p113 = scmp.eq.s32.totalorder %s33, 1
      %p114 = por %p112, %p113
      %p115 = scmp.ne.s32.totalorder %s106, %s107
      %p116 = scmp.eq.s32.totalorder %s33, 0
      %p117 = por %p115, %p116
      %p118 = scmp.ne.s32.totalorder %s106, %s107
      %p119 = scmp.eq.s32.totalorder %s34, 1
      %p120 = por %p118, %p119
      %p122 = scmp.ne.s32.totalorder %s107, %s121
      %p123 = scmp.eq.s32.totalorder %s34, 0
      %p124 = por %p122, %p123
      %s126 = sadd.s32 %s125, 1
      %p129 = scmp.eq.s32.totalorder %s28, 1
      %p130 = scmp.ne.s32.totalorder %s125, %s127
      %p131 = scmp.eq.s32.totalorder %s28, 0
      %p132 = por %p130, %p131
      %p133 = scmp.ne.s32.totalorder %s125, %s127
      %p134 = scmp.eq.s32.totalorder %s33, 1
      %p135 = por %p133, %p134
      %p136 = scmp.ne.s32.totalorder %s127, %s128
      %p137 = scmp.eq.s32.totalorder %s33, 0
      %p138 = por %p136, %p137
      %p139 = scmp.ne.s32.totalorder %s127, %s128
      %p140 = scmp.eq.s32.totalorder %s34, 1
      %p141 = por %p139, %p140
      %p143 = scmp.ne.s32.totalorder %s128, %s142
      %p144 = scmp.eq.s32.totalorder %s34, 0
      %p145 = por %p143, %p144
      %s147 = sadd.s32 %s146, 1
      %p150 = scmp.eq.s32.totalorder %s28, 1
      %p151 = scmp.ne.s32.totalorder %s146, %s148
      %p152 = scmp.eq.s32.totalorder %s28, 0
      %p153 = por %p151, %p152
      %p154 = scmp.ne.s32.totalorder %s146, %s148
      %p155 = scmp.eq.s32.totalorder %s33, 1
      %p156 = por %p154, %p155
      %p157 = scmp.ne.s32.totalorder %s148, %s149
      %p158 = scmp.eq.s32.totalorder %s33, 0
      %p159 = por %p157, %p158
      %p160 = scmp.ne.s32.totalorder %s148, %s149
      %p161 = scmp.eq.s32.totalorder %s34, 1
      %p162 = por %p160, %p161
      %p164 = scmp.ne.s32.totalorder %s149, %s163
      %p165 = scmp.eq.s32.totalorder %s34, 0
      %p166 = por %p164, %p165
      %s168 = sadd.s32 %s167, 1
      %p171 = scmp.eq.s32.totalorder %s28, 1
      %p172 = scmp.ne.s32.totalorder %s167, %s169
      %p173 = scmp.eq.s32.totalorder %s28, 0
      %p174 = por %p172, %p173
      %p175 = scmp.ne.s32.totalorder %s167, %s169
      %p176 = scmp.eq.s32.totalorder %s33, 1
      %p177 = por %p175, %p176
      %p178 = scmp.ne.s32.totalorder %s169, %s170
      %p179 = scmp.eq.s32.totalorder %s33, 0
      %p180 = por %p178, %p179
      %p181 = scmp.ne.s32.totalorder %s169, %s170
      %p182 = scmp.eq.s32.totalorder %s34, 1
      %p183 = por %p181, %p182
      %p185 = scmp.ne.s32.totalorder %s170, %s184
      %p186 = scmp.eq.s32.totalorder %s34, 0
      %p187 = por %p185, %p186
      %s189 = sadd.s32 %s188, 1
      %p192 = scmp.eq.s32.totalorder %s28, 1
      %p193 = scmp.ne.s32.totalorder %s188, %s190
      %p194 = scmp.eq.s32.totalorder %s28, 0
      %p195 = por %p193, %p194
      %p196 = scmp.ne.s32.totalorder %s188, %s190
      %p197 = scmp.eq.s32.totalorder %s33, 1
      %p198 = por %p196, %p197
      %p199 = scmp.ne.s32.totalorder %s190, %s191
      %p200 = scmp.eq.s32.totalorder %s33, 0
      %p201 = por %p199, %p200
      %p202 = scmp.ne.s32.totalorder %s190, %s191
      %p203 = scmp.eq.s32.totalorder %s34, 1
      %p204 = por %p202, %p203
      %p206 = scmp.ne.s32.totalorder %s191, %s205
      %p207 = scmp.eq.s32.totalorder %s34, 0
      %p208 = por %p206, %p207
      %s210 = sadd.s32 %s209, 1
      %p213 = scmp.eq.s32.totalorder %s28, 1
      %p214 = scmp.ne.s32.totalorder %s209, %s211
      %p215 = scmp.eq.s32.totalorder %s28, 0
      %p216 = por %p214, %p215
      %p217 = scmp.ne.s32.totalorder %s209, %s211
      %p218 = scmp.eq.s32.totalorder %s33, 1
      %p219 = por %p217, %p218
      %p220 = scmp.ne.s32.totalorder %s211, %s212
      %p221 = scmp.eq.s32.totalorder %s33, 0
      %p222 = por %p220, %p221
      %p223 = scmp.ne.s32.totalorder %s211, %s212
      %p224 = scmp.eq.s32.totalorder %s34, 1
      %p225 = por %p223, %p224
      %p227 = scmp.ne.s32.totalorder %s212, %s226
      %p228 = scmp.eq.s32.totalorder %s34, 0
      %p229 = por %p227, %p228
      %s231 = sadd.s32 %s230, 1
      %p234 = scmp.eq.s32.totalorder %s28, 1
      %p235 = scmp.ne.s32.totalorder %s230, %s232
      %p236 = scmp.eq.s32.totalorder %s28, 0
      %p237 = por %p235, %p236
      %p238 = scmp.ne.s32.totalorder %s230, %s232
      %p239 = scmp.eq.s32.totalorder %s33, 1
      %p240 = por %p238, %p239
      %p241 = scmp.ne.s32.totalorder %s232, %s233
      %p242 = scmp.eq.s32.totalorder %s33, 0
      %p243 = por %p241, %p242
      %p244 = scmp.ne.s32.totalorder %s232, %s233
      %p245 = scmp.eq.s32.totalorder %s34, 1
      %p246 = por %p244, %p245
      %p248 = scmp.ne.s32.totalorder %s233, %s247
      %p249 = scmp.eq.s32.totalorder %s34, 0
      %p250 = por %p248, %p249
      %s252 = sadd.s32 %s251, 1
      %p255 = scmp.eq.s32.totalorder %s28, 1
      %p256 = scmp.ne.s32.totalorder %s251, %s253
      %p257 = scmp.eq.s32.totalorder %s28, 0
      %p258 = por %p256, %p257
      %p259 = scmp.ne.s32.totalorder %s251, %s253
      %p260 = scmp.eq.s32.totalorder %s33, 1
      %p261 = por %p259, %p260
      %p262 = scmp.ne.s32.totalorder %s253, %s254
      %p263 = scmp.eq.s32.totalorder %s33, 0
      %p264 = por %p262, %p263
      %p265 = scmp.ne.s32.totalorder %s253, %s254
      %p266 = scmp.eq.s32.totalorder %s34, 1
      %p267 = por %p265, %p266
      %p269 = scmp.ne.s32.totalorder %s254, %s268
      %p270 = scmp.eq.s32.totalorder %s34, 0
      %p271 = por %p269, %p270
      %s273 = sadd.s32 %s272, 1
      %p276 = scmp.eq.s32.totalorder %s28, 1
      %p277 = scmp.ne.s32.totalorder %s272, %s274
      %p278 = scmp.eq.s32.totalorder %s28, 0
      %p279 = por %p277, %p278
      %p280 = scmp.ne.s32.totalorder %s272, %s274
      %p281 = scmp.eq.s32.totalorder %s33, 1
      %p282 = por %p280, %p281
      %p283 = scmp.ne.s32.totalorder %s274, %s275
      %p284 = scmp.eq.s32.totalorder %s33, 0
      %p285 = por %p283, %p284
      %p286 = scmp.ne.s32.totalorder %s274, %s275
      %p287 = scmp.eq.s32.totalorder %s34, 1
      %p288 = por %p286, %p287
      %p290 = scmp.ne.s32.totalorder %s275, %s289
      %p291 = scmp.eq.s32.totalorder %s34, 0
      %p292 = por %p290, %p291
      %s294 = sadd.s32 %s293, 1
      %p297 = scmp.eq.s32.totalorder %s28, 1
      %p298 = scmp.ne.s32.totalorder %s293, %s295
      %p299 = scmp.eq.s32.totalorder %s28, 0
      %p300 = por %p298, %p299
      %p301 = scmp.ne.s32.totalorder %s293, %s295
      %p302 = scmp.eq.s32.totalorder %s33, 1
      %p303 = por %p301, %p302
      %p304 = scmp.ne.s32.totalorder %s295, %s296
      %p305 = scmp.eq.s32.totalorder %s33, 0
      %p306 = por %p304, %p305
      %p307 = scmp.ne.s32.totalorder %s295, %s296
      %p308 = scmp.eq.s32.totalorder %s34, 1
      %p309 = por %p307, %p308
      %p311 = scmp.ne.s32.totalorder %s296, %s310
      %p312 = scmp.eq.s32.totalorder %s34, 0
      %p313 = por %p311, %p312
      %s315 = sadd.s32 %s314, 1
      %p318 = scmp.eq.s32.totalorder %s28, 1
      %p319 = scmp.ne.s32.totalorder %s314, %s316
      %p320 = scmp.eq.s32.totalorder %s28, 0
      %p321 = por %p319, %p320
      %p322 = scmp.ne.s32.totalorder %s314, %s316
      %p323 = scmp.eq.s32.totalorder %s33, 1
      %p324 = por %p322, %p323
      %p325 = scmp.ne.s32.totalorder %s316, %s317
      %p326 = scmp.eq.s32.totalorder %s33, 0
      %p327 = por %p325, %p326
      %p328 = scmp.ne.s32.totalorder %s316, %s317
      %p329 = scmp.eq.s32.totalorder %s34, 1
      %p330 = por %p328, %p329
      %p332 = scmp.ne.s32.totalorder %s317, %s331
      %p333 = scmp.eq.s32.totalorder %s34, 0
      %p334 = por %p332, %p333
      %s336 = sadd.s32 %s335, 1
      %p339 = scmp.eq.s32.totalorder %s28, 1
      %p340 = scmp.ne.s32.totalorder %s335, %s337
      %p341 = scmp.eq.s32.totalorder %s28, 0
      %p342 = por %p340, %p341
      %p343 = scmp.ne.s32.totalorder %s335, %s337
      %p344 = scmp.eq.s32.totalorder %s33, 1
      %p345 = por %p343, %p344
      %p346 = scmp.ne.s32.totalorder %s337, %s338
      %p347 = scmp.eq.s32.totalorder %s33, 0
      %p348 = por %p346, %p347
      %p349 = scmp.ne.s32.totalorder %s337, %s338
      %p350 = scmp.eq.s32.totalorder %s34, 1
      %p351 = por %p349, %p350
      %p353 = scmp.ne.s32.totalorder %s338, %s352
      %p354 = scmp.eq.s32.totalorder %s34, 0
      %p355 = por %p353, %p354
      %s357 = sadd.s32 %s356, 1
      %p360 = scmp.eq.s32.totalorder %s28, 1
      %p361 = scmp.ne.s32.totalorder %s356, %s358
      %p362 = scmp.eq.s32.totalorder %s28, 0
      %p363 = por %p361, %p362
      %p364 = scmp.ne.s32.totalorder %s356, %s358
      %p365 = scmp.eq.s32.totalorder %s33, 1
      %p366 = por %p364, %p365
      %p367 = scmp.ne.s32.totalorder %s358, %s359
      %p368 = scmp.eq.s32.totalorder %s33, 0
      %p369 = por %p367, %p368
      %p370 = scmp.ne.s32.totalorder %s358, %s359
      %p371 = scmp.eq.s32.totalorder %s34, 1
      %p372 = por %p370, %p371
      %p374 = scmp.ne.s32.totalorder %s359, %s373
      %p375 = scmp.eq.s32.totalorder %s34, 0
      %p376 = por %p374, %p375
      %s378 = sadd.s32 %s377, 1
      %p381 = scmp.eq.s32.totalorder %s28, 1
      %p382 = scmp.ne.s32.totalorder %s377, %s379
      %p383 = scmp.eq.s32.totalorder %s28, 0
      %p384 = por %p382, %p383
      %p385 = scmp.ne.s32.totalorder %s377, %s379
      %p386 = scmp.eq.s32.totalorder %s33, 1
      %p387 = por %p385, %p386
      %p388 = scmp.ne.s32.totalorder %s379, %s380
      %p389 = scmp.eq.s32.totalorder %s33, 0
      %p390 = por %p388, %p389
      %p391 = scmp.ne.s32.totalorder %s379, %s380
      %p392 = scmp.eq.s32.totalorder %s34, 1
      %p393 = por %p391, %p392
      %p395 = scmp.ne.s32.totalorder %s380, %s394
      %p396 = scmp.eq.s32.totalorder %s34, 0
      %p397 = por %p395, %p396
      %s399 = sadd.s32 %s398, 1
      %p402 = scmp.eq.s32.totalorder %s28, 1
      %p403 = scmp.ne.s32.totalorder %s398, %s400
      %p404 = scmp.eq.s32.totalorder %s28, 0
      %p405 = por %p403, %p404
      %p406 = scmp.ne.s32.totalorder %s398, %s400
      %p407 = scmp.eq.s32.totalorder %s33, 1
      %p408 = por %p406, %p407
      %p409 = scmp.ne.s32.totalorder %s400, %s401
      %p410 = scmp.eq.s32.totalorder %s33, 0
      %p411 = por %p409, %p410
      %p412 = scmp.ne.s32.totalorder %s400, %s401
      %p413 = scmp.eq.s32.totalorder %s34, 1
      %p414 = por %p412, %p413
      %p416 = scmp.ne.s32.totalorder %s401, %s415
      %p417 = scmp.eq.s32.totalorder %s34, 0
      %p418 = por %p416, %p417
      %s420 = sadd.s32 %s419, 1
      %p423 = scmp.eq.s32.totalorder %s28, 1
      %p424 = scmp.ne.s32.totalorder %s419, %s421
      %p425 = scmp.eq.s32.totalorder %s28, 0
      %p426 = por %p424, %p425
      %p427 = scmp.ne.s32.totalorder %s419, %s421
      %p428 = scmp.eq.s32.totalorder %s33, 1
      %p429 = por %p427, %p428
      %p430 = scmp.ne.s32.totalorder %s421, %s422
      %p431 = scmp.eq.s32.totalorder %s33, 0
      %p432 = por %p430, %p431
      %p433 = scmp.ne.s32.totalorder %s421, %s422
      %p434 = scmp.eq.s32.totalorder %s34, 1
      %p435 = por %p433, %p434
      %p437 = scmp.ne.s32.totalorder %s422, %s436
      %p438 = scmp.eq.s32.totalorder %s34, 0
      %p439 = por %p437, %p438
      %s440 = ssub.s32 %s28, %s35
      %p441 = scmp.eq.s32.totalorder %s440, 0
      %s443 = sadd.s32 %s442, 1
      %s444 = scalar_select %p441, %s442, %s443
      %p447 = pneg %p441
      %p448 = scmp.eq.s32.totalorder %s28, 1
      %p449 = por %p447, %p448
      %p450 = scmp.ne.s32.totalorder %s442, %s445
      %p451 = scmp.eq.s32.totalorder %s28, 0
      %p452 = por %p450, %p451
      %p453 = scmp.ne.s32.totalorder %s442, %s445
      %p454 = scmp.eq.s32.totalorder %s33, 1
      %p455 = por %p453, %p454
      %p456 = scmp.ne.s32.totalorder %s445, %s446
      %p457 = scmp.eq.s32.totalorder %s33, 0
      %p458 = por %p456, %p457
      %p459 = scmp.ne.s32.totalorder %s445, %s446
      %p460 = scmp.eq.s32.totalorder %s34, 1
      %p461 = por %p459, %p460
      %p463 = scmp.ne.s32.totalorder %s446, %s462
      %p464 = scmp.eq.s32.totalorder %s34, 0
      %p465 = por %p463, %p464
      %p466 = scmp.le.s32.totalorder 1, %s28
      %p467 = scmp.lt.s32.totalorder %s28, 3
      %p468 = pnand %p466, %p467
      %p469 = pneg %p468
      // Predicated region
      $region9: #{autoencoder_forward.1} parent=5 // pred_check
        _
      $region10: #{autoencoder_forward.1} parent=5 // pred_check_branch
        %471 = sbr.rel (%p468) target = $region12
      $region11: #{autoencoder_forward.1} parent=5 // pred_region
        %s472 = ssub.s32 %s28, 1
        // Predicated region
        $region13: #{autoencoder_forward.1} parent=11 // pred_check
          %p473 = pneg %p75
        $region14: #{autoencoder_forward.1} parent=11 // pred_check_branch
          %475 = sbr.rel (%p473) target = $region16
        $region15: #{autoencoder_forward.1} parent=11 // pred_region
          _
        $region16: #{autoencoder_forward.1} parent=11 // pred_fallthru
          _
        // Predicated region
        $region17: #{autoencoder_forward.1} parent=11 // pred_check
          %p476 = pneg %p96
        $region18: #{autoencoder_forward.1} parent=11 // pred_check_branch
          %478 = sbr.rel (%p476) target = $region20
        $region19: #{autoencoder_forward.1} parent=11 // pred_region
          _
        $region20: #{autoencoder_forward.1} parent=11 // pred_fallthru
          _
        // Predicated region
        $region21: #{autoencoder_forward.1} parent=11 // pred_check
          %p479 = pneg %p117
        $region22: #{autoencoder_forward.1} parent=11 // pred_check_branch
          %481 = sbr.rel (%p479) target = $region24
        $region23: #{autoencoder_forward.1} parent=11 // pred_region
          _
        $region24: #{autoencoder_forward.1} parent=11 // pred_fallthru
          _
        // Predicated region
        $region25: #{autoencoder_forward.1} parent=11 // pred_check
          %p482 = pneg %p138
        $region26: #{autoencoder_forward.1} parent=11 // pred_check_branch
          %484 = sbr.rel (%p482) target = $region28
        $region27: #{autoencoder_forward.1} parent=11 // pred_region
          _
        $region28: #{autoencoder_forward.1} parent=11 // pred_fallthru
          _
        // Predicated region
        $region29: #{autoencoder_forward.1} parent=11 // pred_check
          %p485 = pneg %p159
        $region30: #{autoencoder_forward.1} parent=11 // pred_check_branch
          %487 = sbr.rel (%p485) target = $region32
        $region31: #{autoencoder_forward.1} parent=11 // pred_region
          _
        $region32: #{autoencoder_forward.1} parent=11 // pred_fallthru
          _
        // Predicated region
        $region33: #{autoencoder_forward.1} parent=11 // pred_check
          %p488 = pneg %p180
        $region34: #{autoencoder_forward.1} parent=11 // pred_check_branch
          %490 = sbr.rel (%p488) target = $region36
        $region35: #{autoencoder_forward.1} parent=11 // pred_region
          _
        $region36: #{autoencoder_forward.1} parent=11 // pred_fallthru
          _
        // Predicated region
        $region37: #{autoencoder_forward.1} parent=11 // pred_check
          %p491 = pneg %p201
        $region38: #{autoencoder_forward.1} parent=11 // pred_check_branch
          %493 = sbr.rel (%p491) target = $region40
        $region39: #{autoencoder_forward.1} parent=11 // pred_region
          _
        $region40: #{autoencoder_forward.1} parent=11 // pred_fallthru
          _
        // Predicated region
        $region41: #{autoencoder_forward.1} parent=11 // pred_check
          %p494 = pneg %p222
        $region42: #{autoencoder_forward.1} parent=11 // pred_check_branch
          %496 = sbr.rel (%p494) target = $region44
        $region43: #{autoencoder_forward.1} parent=11 // pred_region
          _
        $region44: #{autoencoder_forward.1} parent=11 // pred_fallthru
          _
        // Predicated region
        $region45: #{autoencoder_forward.1} parent=11 // pred_check
          %p497 = pneg %p243
        $region46: #{autoencoder_forward.1} parent=11 // pred_check_branch
          %499 = sbr.rel (%p497) target = $region48
        $region47: #{autoencoder_forward.1} parent=11 // pred_region
          _
        $region48: #{autoencoder_forward.1} parent=11 // pred_fallthru
          _
        // Predicated region
        $region49: #{autoencoder_forward.1} parent=11 // pred_check
          %p500 = pneg %p264
        $region50: #{autoencoder_forward.1} parent=11 // pred_check_branch
          %502 = sbr.rel (%p500) target = $region52
        $region51: #{autoencoder_forward.1} parent=11 // pred_region
          _
        $region52: #{autoencoder_forward.1} parent=11 // pred_fallthru
          _
        // Predicated region
        $region53: #{autoencoder_forward.1} parent=11 // pred_check
          %p503 = pneg %p285
        $region54: #{autoencoder_forward.1} parent=11 // pred_check_branch
          %505 = sbr.rel (%p503) target = $region56
        $region55: #{autoencoder_forward.1} parent=11 // pred_region
          _
        $region56: #{autoencoder_forward.1} parent=11 // pred_fallthru
          _
        // Predicated region
        $region57: #{autoencoder_forward.1} parent=11 // pred_check
          %p506 = pneg %p306
        $region58: #{autoencoder_forward.1} parent=11 // pred_check_branch
          %508 = sbr.rel (%p506) target = $region60
        $region59: #{autoencoder_forward.1} parent=11 // pred_region
          _
        $region60: #{autoencoder_forward.1} parent=11 // pred_fallthru
          _
        // Predicated region
        $region61: #{autoencoder_forward.1} parent=11 // pred_check
          %p509 = pneg %p327
        $region62: #{autoencoder_forward.1} parent=11 // pred_check_branch
          %511 = sbr.rel (%p509) target = $region64
        $region63: #{autoencoder_forward.1} parent=11 // pred_region
          _
        $region64: #{autoencoder_forward.1} parent=11 // pred_fallthru
          _
        // Predicated region
        $region65: #{autoencoder_forward.1} parent=11 // pred_check
          %p512 = pneg %p348
        $region66: #{autoencoder_forward.1} parent=11 // pred_check_branch
          %514 = sbr.rel (%p512) target = $region68
        $region67: #{autoencoder_forward.1} parent=11 // pred_region
          _
        $region68: #{autoencoder_forward.1} parent=11 // pred_fallthru
          _
        // Predicated region
        $region69: #{autoencoder_forward.1} parent=11 // pred_check
          %p515 = pneg %p369
        $region70: #{autoencoder_forward.1} parent=11 // pred_check_branch
          %517 = sbr.rel (%p515) target = $region72
        $region71: #{autoencoder_forward.1} parent=11 // pred_region
          _
        $region72: #{autoencoder_forward.1} parent=11 // pred_fallthru
          _
        // Predicated region
        $region73: #{autoencoder_forward.1} parent=11 // pred_check
          %p518 = pneg %p390
        $region74: #{autoencoder_forward.1} parent=11 // pred_check_branch
          %520 = sbr.rel (%p518) target = $region76
        $region75: #{autoencoder_forward.1} parent=11 // pred_region
          _
        $region76: #{autoencoder_forward.1} parent=11 // pred_fallthru
          _
        // Predicated region
        $region77: #{autoencoder_forward.1} parent=11 // pred_check
          %p521 = pneg %p411
        $region78: #{autoencoder_forward.1} parent=11 // pred_check_branch
          %523 = sbr.rel (%p521) target = $region80
        $region79: #{autoencoder_forward.1} parent=11 // pred_region
          _
        $region80: #{autoencoder_forward.1} parent=11 // pred_fallthru
          _
        // Predicated region
        $region81: #{autoencoder_forward.1} parent=11 // pred_check
          %p524 = pneg %p432
        $region82: #{autoencoder_forward.1} parent=11 // pred_check_branch
          %526 = sbr.rel (%p524) target = $region84
        $region83: #{autoencoder_forward.1} parent=11 // pred_region
          _
        $region84: #{autoencoder_forward.1} parent=11 // pred_fallthru
          _
      $region12: #{autoencoder_forward.1} parent=5 // pred_fallthru
        _
      %p527 = scmp.lt.s32.totalorder %s28, 2
      // Predicated region
      $region85: #{autoencoder_forward.1} parent=5 // pred_check
        %p528 = pneg %p527
      $region86: #{autoencoder_forward.1} parent=5 // pred_check_branch
        %530 = sbr.rel (%p528) target = $region88
      $region87: #{autoencoder_forward.1} parent=5 // pred_region
        // Predicated region
        $region89: #{autoencoder_forward.1} parent=87 // pred_check
          %p531 = pneg %p48
        $region90: #{autoencoder_forward.1} parent=87 // pred_check_branch
          %533 = sbr.rel (%p531) target = $region92
        $region91: #{autoencoder_forward.1} parent=87 // pred_region
          %s534 = smul.u32 2, %s28
          %p535 = scmp.lt.s32.totalorder %s534, 3
          %s536 = scalar_select %p535, %s534, 3
          %s537 = smul.addr %s536, 8
          %s538 = scalar_lea.vmem %s0, %s537
          %s539 = smul.u32 2, %s28
        $region92: #{autoencoder_forward.1} parent=87 // pred_fallthru
          _
      $region88: #{autoencoder_forward.1} parent=5 // pred_fallthru
        _
      %p540 = scmp.le.s32.totalorder 1, %s28
      %p541 = scmp.lt.s32.totalorder %s28, 3
      %p542 = pnand %p540, %p541
      %p543 = pneg %p542
      // Predicated region
      $region93: #{autoencoder_forward.1} parent=5 // pred_check
        _
      $region94: #{autoencoder_forward.1} parent=5 // pred_check_branch
        %545 = sbr.rel (%p542) target = $region96
      $region95: #{autoencoder_forward.1} parent=5 // pred_region
        %s546 = ssub.s32 %s28, 1
        %s547 = smul.u32 2, %s33
        %p548 = scmp.lt.s32.totalorder %s547, 3
        %s549 = scalar_select %p548, %s547, 3
        %s550 = smul.addr %s549, 8
        %s551 = scalar_lea.vmem %s0, %s550
        %p552 = pneg %p54
        %p553 = pneg %p51
        %p554 = pneg %p75
        %p555 = pneg %p72
        %p556 = pneg %p96
        %p557 = pneg %p93
        %p558 = pneg %p117
        %p559 = pneg %p114
        %p560 = pneg %p138
        %p561 = pneg %p135
        %p562 = pneg %p159
        %p563 = pneg %p156
        %p564 = pneg %p180
        %p565 = pneg %p177
        %p566 = pneg %p201
        %p567 = pneg %p198
        %p568 = pneg %p222
        %p569 = pneg %p219
        %p570 = pneg %p243
        %p571 = pneg %p240
        %p572 = pneg %p264
        %p573 = pneg %p261
        %p574 = pneg %p285
        %p575 = pneg %p282
        %p576 = pneg %p306
        %p577 = pneg %p303
        %p578 = pneg %p327
        %p579 = pneg %p324
        %p580 = pneg %p348
        %p581 = pneg %p345
        %p582 = pneg %p369
        %p583 = pneg %p366
        %p584 = pneg %p390
        %p585 = pneg %p387
        %p586 = pneg %p411
        %p587 = pneg %p408
        %p588 = pneg %p432
        %p589 = pneg %p429
        %p590 = pneg %p458
        %p591 = pneg %p455
        %s592 = sand.u32 %s445, 1
        %s593 = scalar_lea.sflag [#allocation3], %s592
        %s594 = sand.u32 %s445, 1
        %s595 = smul.addr %s594, 16
        %s596 = scalar_lea.vmem [#allocation2], %s595
        %s597 = smul.u32 2, %s33
        %p598 = scmp.lt.s32.totalorder %s597, 3
        %s599 = scalar_select %p598, %s597, 3
        %s600 = smul.addr %s599, 8
        %s601 = scalar_lea.vmem %s0, %s600
        %s602 = smul.u32 2, %s33
        %s603 = smul.u32 2, %s33
        %v605 = vld [vmem:[%s601] sm:$0xff]
        %v606 = vld [vmem:[%s601 + $0x8] sm:$0xff]
        %v607 = vld [vmem:[%s1] sm:$0xff]
        %vm608 = vcmask 130048
        %v610 = vsel %vm608, %v607, 0
        %612 = vmatpush.msra.mxu0 0.0
        %613 = vmatpush.msra.mxu0 0.0
        %614 = vmatpush.msra.mxu0 0.0
        %615 = vmatpush.msra.mxu0 0.0
        %616 = vmatpush.msra.mxu0 0.0
        %617 = vmatpush.msra.mxu0 0.0
        %618 = vmatpush.msra.mxu0 0.0
        %619 = vmatpush.msra.mxu0 0.0
        %620 = vmatpush.msra.mxu0 0.0
        %621 = vmatpush.msra.mxu0 0.0
        %622 = vmatpush.msra.mxu0 0.0
        %623 = vmatpush.msra.mxu0 0.0
        %624 = vmatpush.msra.mxu0 0.0
        %625 = vmatpush.msra.mxu0 0.0
        %626 = vmatpush.msra.mxu0 %v606
        %627 = vmatpush.msra.mxu0 %v605
        %628 = vmatmul.f32.gmra.mxu0 %v610
        %v629 = vpop.f32.mrf.mxu0
        %v630 = vadd.f32 0.0, %v629
        %631 = vdwg.mxu0
        %v632 = vpack.c.bf16 %v630, %v630
        %v633 = vld [vmem:[%s2] sm:$0xf]
        %v634 = vld [vmem:[%s2 + $0x4] sm:$0xf]
        %s635 = scalar_lea.vmem %s1, 8
        %v636 = vld [vmem:[%s635] sm:$0xff]
        %v638 = vsel %vm608, %v636, 0
        %640 = vmatpush.msra.mxu0 0.0
        %641 = vmatpush.msra.mxu0 0.0
        %642 = vmatpush.msra.mxu0 0.0
        %643 = vmatpush.msra.mxu0 0.0
        %644 = vmatpush.msra.mxu0 0.0
        %645 = vmatpush.msra.mxu0 0.0
        %646 = vmatpush.msra.mxu0 0.0
        %647 = vmatpush.msra.mxu0 0.0
        %648 = vmatpush.msra.mxu0 0.0
        %649 = vmatpush.msra.mxu0 0.0
        %650 = vmatpush.msra.mxu0 0.0
        %651 = vmatpush.msra.mxu0 0.0
        %652 = vmatpush.msra.mxu0 0.0
        %653 = vmatpush.msra.mxu0 0.0
        %654 = vmatpush.msra.mxu0 %v606
        %655 = vmatpush.msra.mxu0 %v605
        %656 = vmatmul.f32.gmra.mxu0 %v638
        %v657 = vpop.f32.mrf.mxu0
        %v658 = vadd.f32 0.0, %v657
        %659 = vdwg.mxu0
        %v660 = vpack.c.bf16 %v658, %v658
        %s661 = scalar_lea.vmem %s2, 8
        %v662 = vld [vmem:[%s661] sm:$0xf]
        %v663 = vld [vmem:[%s661 + $0x4] sm:$0xf]
        %v666 = vunpack.c.l.b16 %v662
        %v667 = vunpack.c.l.b16 %v663
        %v668 = vpack.c.b16 %v667, %v666
        %v671 = vsel %vm608, %v660, 0
        %673 = vmatpush.bf16.msra.mxu0 0
        %674 = vmatpush.bf16.msra.mxu0 0
        %675 = vmatpush.bf16.msra.mxu0 0
        %676 = vmatpush.bf16.msra.mxu0 0
        %677 = vmatpush.bf16.msra.mxu0 0
        %678 = vmatpush.bf16.msra.mxu0 0
        %679 = vmatpush.bf16.msra.mxu0 0
        %680 = vmatpush.bf16.msra.mxu0 %v668
        %681 = vmatmul.bf16.gmra.mxu0 %v671
        %v682 = vpop.f32.mrf.mxu0
        %v683 = vadd.f32 0.0, %v682
        %v684 = vpop.f32.mrf.mxu0
        %685 = vdwg.mxu0
        %v688 = vunpack.c.l.b16 %v633
        %v689 = vunpack.c.l.b16 %v634
        %v690 = vpack.c.b16 %v689, %v688
        %v693 = vsel %vm608, %v632, 0
        %695 = vmatpush.bf16.msra.mxu0 0
        %696 = vmatpush.bf16.msra.mxu0 0
        %697 = vmatpush.bf16.msra.mxu0 0
        %698 = vmatpush.bf16.msra.mxu0 0
        %699 = vmatpush.bf16.msra.mxu0 0
        %700 = vmatpush.bf16.msra.mxu0 0
        %701 = vmatpush.bf16.msra.mxu0 0
        %702 = vmatpush.bf16.msra.mxu0 %v690
        %703 = vmatmul.bf16.gmra.mxu0 %v693
        %v704 = vpop.f32.mrf.mxu0
        %v705 = vadd.f32 %v683, %v704
        %v706 = vpop.f32.mrf.mxu0
        %707 = vdwg.mxu0
        %s708 = scalar_lea.vmem %s1, 16
        %v709 = vld [vmem:[%s708] sm:$0xff]
        %v711 = vsel %vm608, %v709, 0
        %713 = vmatpush.msra.mxu0 0.0
        %714 = vmatpush.msra.mxu0 0.0
        %715 = vmatpush.msra.mxu0 0.0
        %716 = vmatpush.msra.mxu0 0.0
        %717 = vmatpush.msra.mxu0 0.0
        %718 = vmatpush.msra.mxu0 0.0
        %719 = vmatpush.msra.mxu0 0.0
        %720 = vmatpush.msra.mxu0 0.0
        %721 = vmatpush.msra.mxu0 0.0
        %722 = vmatpush.msra.mxu0 0.0
        %723 = vmatpush.msra.mxu0 0.0
        %724 = vmatpush.msra.mxu0 0.0
        %725 = vmatpush.msra.mxu0 0.0
        %726 = vmatpush.msra.mxu0 0.0
        %727 = vmatpush.msra.mxu0 %v606
        %728 = vmatpush.msra.mxu0 %v605
        %729 = vmatmul.f32.gmra.mxu0 %v711
        %v730 = vpop.f32.mrf.mxu0
        %v731 = vadd.f32 0.0, %v730
        %732 = vdwg.mxu0
        %v733 = vpack.c.bf16 %v731, %v731
        %s734 = scalar_lea.vmem %s2, 16
        %v735 = vld [vmem:[%s734] sm:$0xf]
        %v736 = vld [vmem:[%s734 + $0x4] sm:$0xf]
        %v739 = vunpack.c.l.b16 %v735
        %v740 = vunpack.c.l.b16 %v736
        %v741 = vpack.c.b16 %v740, %v739
        %v744 = vsel %vm608, %v733, 0
        %746 = vmatpush.bf16.msra.mxu0 0
        %747 = vmatpush.bf16.msra.mxu0 0
        %748 = vmatpush.bf16.msra.mxu0 0
        %749 = vmatpush.bf16.msra.mxu0 0
        %750 = vmatpush.bf16.msra.mxu0 0
        %751 = vmatpush.bf16.msra.mxu0 0
        %752 = vmatpush.bf16.msra.mxu0 0
        %753 = vmatpush.bf16.msra.mxu0 %v741
        %754 = vmatmul.bf16.gmra.mxu0 %v744
        %v755 = vpop.f32.mrf.mxu0
        %v756 = vadd.f32 0.0, %v755
        %v757 = vpop.f32.mrf.mxu0
        %758 = vdwg.mxu0
        %v759 = vadd.f32 %v705, %v756
        %v760 = vld [vmem:[%s3] sm:$0x1]
        %v762 = vperm.slane %v760, 0
        %v764 = vadd.f32 %v759, %v762
        %v765 = vmax.f32 %v764, 0.0
        %v766 = vld [vmem:[%s4] sm:$0xf]
        %vm767 = vcmask 64512
        %v769 = vsel %vm767, %v766, 0
        %771 = vmatpush.msra.mxu0 0.0
        %772 = vmatpush.msra.mxu0 0.0
        %773 = vmatpush.msra.mxu0 0.0
        %774 = vmatpush.msra.mxu0 0.0
        %775 = vmatpush.msra.mxu0 0.0
        %776 = vmatpush.msra.mxu0 0.0
        %777 = vmatpush.msra.mxu0 0.0
        %778 = vmatpush.msra.mxu0 0.0
        %779 = vmatpush.msra.mxu0 0.0
        %780 = vmatpush.msra.mxu0 0.0
        %781 = vmatpush.msra.mxu0 0.0
        %782 = vmatpush.msra.mxu0 0.0
        %783 = vmatpush.msra.mxu0 0.0
        %784 = vmatpush.msra.mxu0 0.0
        %785 = vmatpush.msra.mxu0 0.0
        %786 = vmatpush.msra.mxu0 %v765
        %787 = vmatmul.f32.gmra.mxu0 %v769
        %v788 = vpop.f32.mrf.mxu0
        %v789 = vadd.f32 0.0, %v788
        %790 = vdwg.mxu0
        %v791 = vpack.c.bf16 %v789, %v789
        %v792 = vld [vmem:[%s5] sm:$0xf]
        %v793 = vld [vmem:[%s5 + $0x4] sm:$0xf]
        %v794 = vld [vmem:[%s5 + $0x8] sm:$0xf]
        %v795 = vld [vmem:[%s5 + $0xc] sm:$0xf]
        %v796 = vld [vmem:[%s5 + $0x10] sm:$0xf]
        %v797 = vld [vmem:[%s5 + $0x14] sm:$0xf]
        %v798 = vld [vmem:[%s5 + $0x18] sm:$0xf]
        %v799 = vld [vmem:[%s5 + $0x1c] sm:$0xf]
        %v800 = vld [vmem:[%s5 + $0x20] sm:$0xf]
        %v801 = vld [vmem:[%s5 + $0x24] sm:$0xf]
        %v802 = vld [vmem:[%s5 + $0x28] sm:$0xf]
        %v803 = vld [vmem:[%s5 + $0x2c] sm:$0xf]
        %v804 = vld [vmem:[%s5 + $0x30] sm:$0xf]
        %v805 = vld [vmem:[%s5 + $0x34] sm:$0xf]
        %v806 = vld [vmem:[%s5 + $0x38] sm:$0xf]
        %v807 = vld [vmem:[%s5 + $0x3c] sm:$0xf]
        %s808 = scalar_lea.vmem %s4, 4
        %v809 = vld [vmem:[%s808] sm:$0xf]
        %v811 = vsel %vm767, %v809, 0
        %813 = vmatpush.msra.mxu0 0.0
        %814 = vmatpush.msra.mxu0 0.0
        %815 = vmatpush.msra.mxu0 0.0
        %816 = vmatpush.msra.mxu0 0.0
        %817 = vmatpush.msra.mxu0 0.0
        %818 = vmatpush.msra.mxu0 0.0
        %819 = vmatpush.msra.mxu0 0.0
        %820 = vmatpush.msra.mxu0 0.0
        %821 = vmatpush.msra.mxu0 0.0
        %822 = vmatpush.msra.mxu0 0.0
        %823 = vmatpush.msra.mxu0 0.0
        %824 = vmatpush.msra.mxu0 0.0
        %825 = vmatpush.msra.mxu0 0.0
        %826 = vmatpush.msra.mxu0 0.0
        %827 = vmatpush.msra.mxu0 0.0
        %828 = vmatpush.msra.mxu0 %v765
        %829 = vmatmul.f32.gmra.mxu0 %v811
        %v830 = vpop.f32.mrf.mxu0
        %v831 = vadd.f32 0.0, %v830
        %832 = vdwg.mxu0
        %v833 = vpack.c.bf16 %v831, %v831
        %s834 = scalar_lea.vmem %s5, 64
        %v835 = vld [vmem:[%s834] sm:$0xf]
        %v836 = vld [vmem:[%s834 + $0x4] sm:$0xf]
        %v837 = vld [vmem:[%s834 + $0x8] sm:$0xf]
        %v838 = vld [vmem:[%s834 + $0xc] sm:$0xf]
        %v839 = vld [vmem:[%s834 + $0x10] sm:$0xf]
        %v840 = vld [vmem:[%s834 + $0x14] sm:$0xf]
        %v841 = vld [vmem:[%s834 + $0x18] sm:$0xf]
        %v842 = vld [vmem:[%s834 + $0x1c] sm:$0xf]
        %v843 = vld [vmem:[%s834 + $0x20] sm:$0xf]
        %v844 = vld [vmem:[%s834 + $0x24] sm:$0xf]
        %v845 = vld [vmem:[%s834 + $0x28] sm:$0xf]
        %v846 = vld [vmem:[%s834 + $0x2c] sm:$0xf]
        %v847 = vld [vmem:[%s834 + $0x30] sm:$0xf]
        %v848 = vld [vmem:[%s834 + $0x34] sm:$0xf]
        %v849 = vld [vmem:[%s834 + $0x38] sm:$0xf]
        %v850 = vld [vmem:[%s834 + $0x3c] sm:$0xf]
        %v867 = vunpack.c.l.b16 %v835
        %v868 = vunpack.c.l.b16 %v836
        %v869 = vunpack.c.l.b16 %v837
        %v870 = vunpack.c.l.b16 %v838
        %v871 = vunpack.c.l.b16 %v839
        %v872 = vunpack.c.l.b16 %v840
        %v873 = vunpack.c.l.b16 %v841
        %v874 = vunpack.c.l.b16 %v842
        %v875 = vunpack.c.l.b16 %v843
        %v876 = vunpack.c.l.b16 %v844
        %v877 = vunpack.c.l.b16 %v845
        %v878 = vunpack.c.l.b16 %v846
        %v879 = vunpack.c.l.b16 %v847
        %v880 = vunpack.c.l.b16 %v848
        %v881 = vunpack.c.l.b16 %v849
        %v882 = vunpack.c.l.b16 %v850
        %v883 = vpack.c.b16 %v868, %v867
        %v884 = vpack.c.b16 %v870, %v869
        %v885 = vpack.c.b16 %v872, %v871
        %v886 = vpack.c.b16 %v874, %v873
        %v887 = vpack.c.b16 %v876, %v875
        %v888 = vpack.c.b16 %v878, %v877
        %v889 = vpack.c.b16 %v880, %v879
        %v890 = vpack.c.b16 %v882, %v881
        %899 = vmatpush.bf16.msra.mxu0 %v890
        %900 = vmatpush.bf16.msra.mxu0 %v889
        %901 = vmatpush.bf16.msra.mxu0 %v888
        %902 = vmatpush.bf16.msra.mxu0 %v887
        %903 = vmatpush.bf16.msra.mxu0 %v886
        %904 = vmatpush.bf16.msra.mxu0 %v885
        %905 = vmatpush.bf16.msra.mxu0 %v884
        %906 = vmatpush.bf16.msra.mxu0 %v883
        %907 = vmatmul.bf16.gmra.mxu0 %v833
        %v908 = vpop.f32.mrf.mxu0
        %v909 = vadd.f32 0.0, %v908
        %v910 = vpop.f32.mrf.mxu0
        %911 = vdwg.mxu0
        %v928 = vunpack.c.l.b16 %v792
        %v929 = vunpack.c.l.b16 %v793
        %v930 = vunpack.c.l.b16 %v794
        %v931 = vunpack.c.l.b16 %v795
        %v932 = vunpack.c.l.b16 %v796
        %v933 = vunpack.c.l.b16 %v797
        %v934 = vunpack.c.l.b16 %v798
        %v935 = vunpack.c.l.b16 %v799
        %v936 = vunpack.c.l.b16 %v800
        %v937 = vunpack.c.l.b16 %v801
        %v938 = vunpack.c.l.b16 %v802
        %v939 = vunpack.c.l.b16 %v803
        %v940 = vunpack.c.l.b16 %v804
        %v941 = vunpack.c.l.b16 %v805
        %v942 = vunpack.c.l.b16 %v806
        %v943 = vunpack.c.l.b16 %v807
        %v944 = vpack.c.b16 %v929, %v928
        %v945 = vpack.c.b16 %v931, %v930
        %v946 = vpack.c.b16 %v933, %v932
        %v947 = vpack.c.b16 %v935, %v934
        %v948 = vpack.c.b16 %v937, %v936
        %v949 = vpack.c.b16 %v939, %v938
        %v950 = vpack.c.b16 %v941, %v940
        %v951 = vpack.c.b16 %v943, %v942
        %960 = vmatpush.bf16.msra.mxu0 %v951
        %961 = vmatpush.bf16.msra.mxu0 %v950
        %962 = vmatpush.bf16.msra.mxu0 %v949
        %963 = vmatpush.bf16.msra.mxu0 %v948
        %964 = vmatpush.bf16.msra.mxu0 %v947
        %965 = vmatpush.bf16.msra.mxu0 %v946
        %966 = vmatpush.bf16.msra.mxu0 %v945
        %967 = vmatpush.bf16.msra.mxu0 %v944
        %968 = vmatmul.bf16.gmra.mxu0 %v791
        %v969 = vpop.f32.mrf.mxu0
        %v970 = vadd.f32 %v909, %v969
        %v971 = vpop.f32.mrf.mxu0
        %972 = vdwg.mxu0
        %s973 = scalar_lea.vmem %s4, 8
        %v974 = vld [vmem:[%s973] sm:$0xf]
        %v976 = vsel %vm767, %v974, 0
        %978 = vmatpush.msra.mxu0 0.0
        %979 = vmatpush.msra.mxu0 0.0
        %980 = vmatpush.msra.mxu0 0.0
        %981 = vmatpush.msra.mxu0 0.0
        %982 = vmatpush.msra.mxu0 0.0
        %983 = vmatpush.msra.mxu0 0.0
        %984 = vmatpush.msra.mxu0 0.0
        %985 = vmatpush.msra.mxu0 0.0
        %986 = vmatpush.msra.mxu0 0.0
        %987 = vmatpush.msra.mxu0 0.0
        %988 = vmatpush.msra.mxu0 0.0
        %989 = vmatpush.msra.mxu0 0.0
        %990 = vmatpush.msra.mxu0 0.0
        %991 = vmatpush.msra.mxu0 0.0
        %992 = vmatpush.msra.mxu0 0.0
        %993 = vmatpush.msra.mxu0 %v765
        %994 = vmatmul.f32.gmra.mxu0 %v976
        %v995 = vpop.f32.mrf.mxu0
        %v996 = vadd.f32 0.0, %v995
        %997 = vdwg.mxu0
        %v998 = vpack.c.bf16 %v996, %v996
        %s999 = scalar_lea.vmem %s5, 128
        %v1000 = vld [vmem:[%s999] sm:$0xf]
        %v1001 = vld [vmem:[%s999 + $0x4] sm:$0xf]
        %v1002 = vld [vmem:[%s999 + $0x8] sm:$0xf]
        %v1003 = vld [vmem:[%s999 + $0xc] sm:$0xf]
        %v1004 = vld [vmem:[%s999 + $0x10] sm:$0xf]
        %v1005 = vld [vmem:[%s999 + $0x14] sm:$0xf]
        %v1006 = vld [vmem:[%s999 + $0x18] sm:$0xf]
        %v1007 = vld [vmem:[%s999 + $0x1c] sm:$0xf]
        %v1008 = vld [vmem:[%s999 + $0x20] sm:$0xf]
        %v1009 = vld [vmem:[%s999 + $0x24] sm:$0xf]
        %v1010 = vld [vmem:[%s999 + $0x28] sm:$0xf]
        %v1011 = vld [vmem:[%s999 + $0x2c] sm:$0xf]
        %v1012 = vld [vmem:[%s999 + $0x30] sm:$0xf]
        %v1013 = vld [vmem:[%s999 + $0x34] sm:$0xf]
        %v1014 = vld [vmem:[%s999 + $0x38] sm:$0xf]
        %v1015 = vld [vmem:[%s999 + $0x3c] sm:$0xf]
        %v1032 = vunpack.c.l.b16 %v1000
        %v1033 = vunpack.c.l.b16 %v1001
        %v1034 = vunpack.c.l.b16 %v1002
        %v1035 = vunpack.c.l.b16 %v1003
        %v1036 = vunpack.c.l.b16 %v1004
        %v1037 = vunpack.c.l.b16 %v1005
        %v1038 = vunpack.c.l.b16 %v1006
        %v1039 = vunpack.c.l.b16 %v1007
        %v1040 = vunpack.c.l.b16 %v1008
        %v1041 = vunpack.c.l.b16 %v1009
        %v1042 = vunpack.c.l.b16 %v1010
        %v1043 = vunpack.c.l.b16 %v1011
        %v1044 = vunpack.c.l.b16 %v1012
        %v1045 = vunpack.c.l.b16 %v1013
        %v1046 = vunpack.c.l.b16 %v1014
        %v1047 = vunpack.c.l.b16 %v1015
        %v1048 = vpack.c.b16 %v1033, %v1032
        %v1049 = vpack.c.b16 %v1035, %v1034
        %v1050 = vpack.c.b16 %v1037, %v1036
        %v1051 = vpack.c.b16 %v1039, %v1038
        %v1052 = vpack.c.b16 %v1041, %v1040
        %v1053 = vpack.c.b16 %v1043, %v1042
        %v1054 = vpack.c.b16 %v1045, %v1044
        %v1055 = vpack.c.b16 %v1047, %v1046
        %1064 = vmatpush.bf16.msra.mxu0 %v1055
        %1065 = vmatpush.bf16.msra.mxu0 %v1054
        %1066 = vmatpush.bf16.msra.mxu0 %v1053
        %1067 = vmatpush.bf16.msra.mxu0 %v1052
        %1068 = vmatpush.bf16.msra.mxu0 %v1051
        %1069 = vmatpush.bf16.msra.mxu0 %v1050
        %1070 = vmatpush.bf16.msra.mxu0 %v1049
        %1071 = vmatpush.bf16.msra.mxu0 %v1048
        %1072 = vmatmul.bf16.gmra.mxu0 %v998
        %v1073 = vpop.f32.mrf.mxu0
        %v1074 = vadd.f32 0.0, %v1073
        %v1075 = vpop.f32.mrf.mxu0
        %1076 = vdwg.mxu0
        %v1077 = vadd.f32 %v970, %v1074
        %v1078 = vld [vmem:[%s6] sm:$0x1]
        %v1080 = vperm.slane %v1078, 0
        %v1082 = vadd.f32 %v1077, %v1080
        %v1083 = vmax.f32 %v1082, 0.0
        %v1084 = vld [vmem:[%s7] sm:$0x3]
        %vm1085 = vcmask 31744
        %v1087 = vsel %vm1085, %v1084, 0
        %vm1089 = vcmask 1043456
        %v1091 = vsel %vm1089, %v1083, 0
        %1093 = vmatpush.msra.mxu0 0.0
        %1094 = vmatpush.msra.mxu0 0.0
        %1095 = vmatpush.msra.mxu0 0.0
        %1096 = vmatpush.msra.mxu0 0.0
        %1097 = vmatpush.msra.mxu0 0.0
        %1098 = vmatpush.msra.mxu0 0.0
        %1099 = vmatpush.msra.mxu0 0.0
        %1100 = vmatpush.msra.mxu0 0.0
        %1101 = vmatpush.msra.mxu0 0.0
        %1102 = vmatpush.msra.mxu0 0.0
        %1103 = vmatpush.msra.mxu0 0.0
        %1104 = vmatpush.msra.mxu0 0.0
        %1105 = vmatpush.msra.mxu0 0.0
        %1106 = vmatpush.msra.mxu0 0.0
        %1107 = vmatpush.msra.mxu0 0.0
        %1108 = vmatpush.msra.mxu0 %v1091
        %1109 = vmatmul.f32.gmra.mxu0 %v1087
        %v1110 = vpop.f32.mrf.mxu0
        %v1111 = vadd.f32 0.0, %v1110
        %1112 = vdwg.mxu0
        %v1113 = vpack.c.bf16 %v1111, %v1111
        %v1114 = vld [vmem:[%s8] sm:$0xf]
        %v1115 = vld [vmem:[%s8 + $0x4] sm:$0xf]
        %v1116 = vld [vmem:[%s8 + $0x8] sm:$0xf]
        %v1117 = vld [vmem:[%s8 + $0xc] sm:$0xf]
        %v1118 = vld [vmem:[%s8 + $0x10] sm:$0xf]
        %v1119 = vld [vmem:[%s8 + $0x14] sm:$0xf]
        %v1120 = vld [vmem:[%s8 + $0x18] sm:$0xf]
        %v1121 = vld [vmem:[%s8 + $0x1c] sm:$0xf]
        %v1122 = vld [vmem:[%s8 + $0x20] sm:$0xf]
        %v1123 = vld [vmem:[%s8 + $0x24] sm:$0xf]
        %v1124 = vld [vmem:[%s8 + $0x28] sm:$0xf]
        %v1125 = vld [vmem:[%s8 + $0x2c] sm:$0xf]
        %v1126 = vld [vmem:[%s8 + $0x30] sm:$0xf]
        %v1127 = vld [vmem:[%s8 + $0x34] sm:$0xf]
        %v1128 = vld [vmem:[%s8 + $0x38] sm:$0xf]
        %v1129 = vld [vmem:[%s8 + $0x3c] sm:$0xf]
        %s1130 = scalar_lea.vmem %s7, 2
        %v1131 = vld [vmem:[%s1130] sm:$0x3]
        %v1133 = vsel %vm1085, %v1131, 0
        %1135 = vmatpush.msra.mxu0 0.0
        %1136 = vmatpush.msra.mxu0 0.0
        %1137 = vmatpush.msra.mxu0 0.0
        %1138 = vmatpush.msra.mxu0 0.0
        %1139 = vmatpush.msra.mxu0 0.0
        %1140 = vmatpush.msra.mxu0 0.0
        %1141 = vmatpush.msra.mxu0 0.0
        %1142 = vmatpush.msra.mxu0 0.0
        %1143 = vmatpush.msra.mxu0 0.0
        %1144 = vmatpush.msra.mxu0 0.0
        %1145 = vmatpush.msra.mxu0 0.0
        %1146 = vmatpush.msra.mxu0 0.0
        %1147 = vmatpush.msra.mxu0 0.0
        %1148 = vmatpush.msra.mxu0 0.0
        %1149 = vmatpush.msra.mxu0 0.0
        %1150 = vmatpush.msra.mxu0 %v1091
        %1151 = vmatmul.f32.gmra.mxu0 %v1133
        %v1152 = vpop.f32.mrf.mxu0
        %v1153 = vadd.f32 0.0, %v1152
        %1154 = vdwg.mxu0
        %v1155 = vpack.c.bf16 %v1153, %v1153
        %s1156 = scalar_lea.vmem %s8, 64
        %v1157 = vld [vmem:[%s1156] sm:$0xf]
        %v1158 = vld [vmem:[%s1156 + $0x4] sm:$0xf]
        %v1159 = vld [vmem:[%s1156 + $0x8] sm:$0xf]
        %v1160 = vld [vmem:[%s1156 + $0xc] sm:$0xf]
        %v1161 = vld [vmem:[%s1156 + $0x10] sm:$0xf]
        %v1162 = vld [vmem:[%s1156 + $0x14] sm:$0xf]
        %v1163 = vld [vmem:[%s1156 + $0x18] sm:$0xf]
        %v1164 = vld [vmem:[%s1156 + $0x1c] sm:$0xf]
        %v1165 = vld [vmem:[%s1156 + $0x20] sm:$0xf]
        %v1166 = vld [vmem:[%s1156 + $0x24] sm:$0xf]
        %v1167 = vld [vmem:[%s1156 + $0x28] sm:$0xf]
        %v1168 = vld [vmem:[%s1156 + $0x2c] sm:$0xf]
        %v1169 = vld [vmem:[%s1156 + $0x30] sm:$0xf]
        %v1170 = vld [vmem:[%s1156 + $0x34] sm:$0xf]
        %v1171 = vld [vmem:[%s1156 + $0x38] sm:$0xf]
        %v1172 = vld [vmem:[%s1156 + $0x3c] sm:$0xf]
        %v1189 = vunpack.c.l.b16 %v1157
        %v1190 = vunpack.c.l.b16 %v1158
        %v1191 = vunpack.c.l.b16 %v1159
        %v1192 = vunpack.c.l.b16 %v1160
        %v1193 = vunpack.c.l.b16 %v1161
        %v1194 = vunpack.c.l.b16 %v1162
        %v1195 = vunpack.c.l.b16 %v1163
        %v1196 = vunpack.c.l.b16 %v1164
        %v1197 = vunpack.c.l.b16 %v1165
        %v1198 = vunpack.c.l.b16 %v1166
        %v1199 = vunpack.c.l.b16 %v1167
        %v1200 = vunpack.c.l.b16 %v1168
        %v1201 = vunpack.c.l.b16 %v1169
        %v1202 = vunpack.c.l.b16 %v1170
        %v1203 = vunpack.c.l.b16 %v1171
        %v1204 = vunpack.c.l.b16 %v1172
        %v1205 = vpack.c.b16 %v1190, %v1189
        %v1206 = vpack.c.b16 %v1192, %v1191
        %v1207 = vpack.c.b16 %v1194, %v1193
        %v1208 = vpack.c.b16 %v1196, %v1195
        %v1209 = vpack.c.b16 %v1198, %v1197
        %v1210 = vpack.c.b16 %v1200, %v1199
        %v1211 = vpack.c.b16 %v1202, %v1201
        %v1212 = vpack.c.b16 %v1204, %v1203
        %1221 = vmatpush.bf16.msra.mxu0 %v1212
        %1222 = vmatpush.bf16.msra.mxu0 %v1211
        %1223 = vmatpush.bf16.msra.mxu0 %v1210
        %1224 = vmatpush.bf16.msra.mxu0 %v1209
        %1225 = vmatpush.bf16.msra.mxu0 %v1208
        %1226 = vmatpush.bf16.msra.mxu0 %v1207
        %1227 = vmatpush.bf16.msra.mxu0 %v1206
        %1228 = vmatpush.bf16.msra.mxu0 %v1205
        %1229 = vmatmul.bf16.gmra.mxu0 %v1155
        %v1230 = vpop.f32.mrf.mxu0
        %v1231 = vadd.f32 0.0, %v1230
        %v1232 = vpop.f32.mrf.mxu0
        %1233 = vdwg.mxu0
        %v1250 = vunpack.c.l.b16 %v1114
        %v1251 = vunpack.c.l.b16 %v1115
        %v1252 = vunpack.c.l.b16 %v1116
        %v1253 = vunpack.c.l.b16 %v1117
        %v1254 = vunpack.c.l.b16 %v1118
        %v1255 = vunpack.c.l.b16 %v1119
        %v1256 = vunpack.c.l.b16 %v1120
        %v1257 = vunpack.c.l.b16 %v1121
        %v1258 = vunpack.c.l.b16 %v1122
        %v1259 = vunpack.c.l.b16 %v1123
        %v1260 = vunpack.c.l.b16 %v1124
        %v1261 = vunpack.c.l.b16 %v1125
        %v1262 = vunpack.c.l.b16 %v1126
        %v1263 = vunpack.c.l.b16 %v1127
        %v1264 = vunpack.c.l.b16 %v1128
        %v1265 = vunpack.c.l.b16 %v1129
        %v1266 = vpack.c.b16 %v1251, %v1250
        %v1267 = vpack.c.b16 %v1253, %v1252
        %v1268 = vpack.c.b16 %v1255, %v1254
        %v1269 = vpack.c.b16 %v1257, %v1256
        %v1270 = vpack.c.b16 %v1259, %v1258
        %v1271 = vpack.c.b16 %v1261, %v1260
        %v1272 = vpack.c.b16 %v1263, %v1262
        %v1273 = vpack.c.b16 %v1265, %v1264
        %1282 = vmatpush.bf16.msra.mxu0 %v1273
        %1283 = vmatpush.bf16.msra.mxu0 %v1272
        %1284 = vmatpush.bf16.msra.mxu0 %v1271
        %1285 = vmatpush.bf16.msra.mxu0 %v1270
        %1286 = vmatpush.bf16.msra.mxu0 %v1269
        %1287 = vmatpush.bf16.msra.mxu0 %v1268
        %1288 = vmatpush.bf16.msra.mxu0 %v1267
        %1289 = vmatpush.bf16.msra.mxu0 %v1266
        %1290 = vmatmul.bf16.gmra.mxu0 %v1113
        %v1291 = vpop.f32.mrf.mxu0
        %v1292 = vadd.f32 %v1231, %v1291
        %v1293 = vpop.f32.mrf.mxu0
        %1294 = vdwg.mxu0
        %s1295 = scalar_lea.vmem %s7, 4
        %v1296 = vld [vmem:[%s1295] sm:$0x3]
        %v1298 = vsel %vm1085, %v1296, 0
        %1300 = vmatpush.msra.mxu0 0.0
        %1301 = vmatpush.msra.mxu0 0.0
        %1302 = vmatpush.msra.mxu0 0.0
        %1303 = vmatpush.msra.mxu0 0.0
        %1304 = vmatpush.msra.mxu0 0.0
        %1305 = vmatpush.msra.mxu0 0.0
        %1306 = vmatpush.msra.mxu0 0.0
        %1307 = vmatpush.msra.mxu0 0.0
        %1308 = vmatpush.msra.mxu0 0.0
        %1309 = vmatpush.msra.mxu0 0.0
        %1310 = vmatpush.msra.mxu0 0.0
        %1311 = vmatpush.msra.mxu0 0.0
        %1312 = vmatpush.msra.mxu0 0.0
        %1313 = vmatpush.msra.mxu0 0.0
        %1314 = vmatpush.msra.mxu0 0.0
        %1315 = vmatpush.msra.mxu0 %v1091
        %1316 = vmatmul.f32.gmra.mxu0 %v1298
        %v1317 = vpop.f32.mrf.mxu0
        %v1318 = vadd.f32 0.0, %v1317
        %1319 = vdwg.mxu0
        %v1320 = vpack.c.bf16 %v1318, %v1318
        %s1321 = scalar_lea.vmem %s8, 128
        %v1322 = vld [vmem:[%s1321] sm:$0xf]
        %v1323 = vld [vmem:[%s1321 + $0x4] sm:$0xf]
        %v1324 = vld [vmem:[%s1321 + $0x8] sm:$0xf]
        %v1325 = vld [vmem:[%s1321 + $0xc] sm:$0xf]
        %v1326 = vld [vmem:[%s1321 + $0x10] sm:$0xf]
        %v1327 = vld [vmem:[%s1321 + $0x14] sm:$0xf]
        %v1328 = vld [vmem:[%s1321 + $0x18] sm:$0xf]
        %v1329 = vld [vmem:[%s1321 + $0x1c] sm:$0xf]
        %v1330 = vld [vmem:[%s1321 + $0x20] sm:$0xf]
        %v1331 = vld [vmem:[%s1321 + $0x24] sm:$0xf]
        %v1332 = vld [vmem:[%s1321 + $0x28] sm:$0xf]
        %v1333 = vld [vmem:[%s1321 + $0x2c] sm:$0xf]
        %v1334 = vld [vmem:[%s1321 + $0x30] sm:$0xf]
        %v1335 = vld [vmem:[%s1321 + $0x34] sm:$0xf]
        %v1336 = vld [vmem:[%s1321 + $0x38] sm:$0xf]
        %v1337 = vld [vmem:[%s1321 + $0x3c] sm:$0xf]
        %v1354 = vunpack.c.l.b16 %v1322
        %v1355 = vunpack.c.l.b16 %v1323
        %v1356 = vunpack.c.l.b16 %v1324
        %v1357 = vunpack.c.l.b16 %v1325
        %v1358 = vunpack.c.l.b16 %v1326
        %v1359 = vunpack.c.l.b16 %v1327
        %v1360 = vunpack.c.l.b16 %v1328
        %v1361 = vunpack.c.l.b16 %v1329
        %v1362 = vunpack.c.l.b16 %v1330
        %v1363 = vunpack.c.l.b16 %v1331
        %v1364 = vunpack.c.l.b16 %v1332
        %v1365 = vunpack.c.l.b16 %v1333
        %v1366 = vunpack.c.l.b16 %v1334
        %v1367 = vunpack.c.l.b16 %v1335
        %v1368 = vunpack.c.l.b16 %v1336
        %v1369 = vunpack.c.l.b16 %v1337
        %v1370 = vpack.c.b16 %v1355, %v1354
        %v1371 = vpack.c.b16 %v1357, %v1356
        %v1372 = vpack.c.b16 %v1359, %v1358
        %v1373 = vpack.c.b16 %v1361, %v1360
        %v1374 = vpack.c.b16 %v1363, %v1362
        %v1375 = vpack.c.b16 %v1365, %v1364
        %v1376 = vpack.c.b16 %v1367, %v1366
        %v1377 = vpack.c.b16 %v1369, %v1368
        %1386 = vmatpush.bf16.msra.mxu0 %v1377
        %1387 = vmatpush.bf16.msra.mxu0 %v1376
        %1388 = vmatpush.bf16.msra.mxu0 %v1375
        %1389 = vmatpush.bf16.msra.mxu0 %v1374
        %1390 = vmatpush.bf16.msra.mxu0 %v1373
        %1391 = vmatpush.bf16.msra.mxu0 %v1372
        %1392 = vmatpush.bf16.msra.mxu0 %v1371
        %1393 = vmatpush.bf16.msra.mxu0 %v1370
        %1394 = vmatmul.bf16.gmra.mxu0 %v1320
        %v1395 = vpop.f32.mrf.mxu0
        %v1396 = vadd.f32 0.0, %v1395
        %v1397 = vpop.f32.mrf.mxu0
        %1398 = vdwg.mxu0
        %v1399 = vadd.f32 %v1292, %v1396
        %v1400 = vld [vmem:[%s9] sm:$0x1]
        %v1402 = vperm.slane %v1400, 0
        %v1404 = vadd.f32 %v1399, %v1402
        %v1405 = vmax.f32 %v1404, 0.0
        %v1406 = vld [vmem:[%s10] sm:$0xf]
        %vm1407 = vcmask 15360
        %v1409 = vsel %vm1407, %v1406, 0
        %vm1411 = vcmask 1041408
        %v1413 = vsel %vm1411, %v1405, 0
        %1415 = vmatpush.msra.mxu0 0.0
        %1416 = vmatpush.msra.mxu0 0.0
        %1417 = vmatpush.msra.mxu0 0.0
        %1418 = vmatpush.msra.mxu0 0.0
        %1419 = vmatpush.msra.mxu0 0.0
        %1420 = vmatpush.msra.mxu0 0.0
        %1421 = vmatpush.msra.mxu0 0.0
        %1422 = vmatpush.msra.mxu0 0.0
        %1423 = vmatpush.msra.mxu0 0.0
        %1424 = vmatpush.msra.mxu0 0.0
        %1425 = vmatpush.msra.mxu0 0.0
        %1426 = vmatpush.msra.mxu0 0.0
        %1427 = vmatpush.msra.mxu0 0.0
        %1428 = vmatpush.msra.mxu0 0.0
        %1429 = vmatpush.msra.mxu0 0.0
        %1430 = vmatpush.msra.mxu0 %v1413
        %1431 = vmatmul.f32.gmra.mxu0 %v1409
        %v1432 = vpop.f32.mrf.mxu0
        %v1433 = vadd.f32 0.0, %v1432
        %1434 = vdwg.mxu0
        %v1435 = vpack.c.bf16 %v1433, %v1433
        %v1436 = vld [vmem:[%s11] sm:$0xf]
        %v1437 = vld [vmem:[%s11 + $0x4] sm:$0xf]
        %v1438 = vld [vmem:[%s11 + $0x8] sm:$0xf]
        %v1439 = vld [vmem:[%s11 + $0xc] sm:$0xf]
        %v1440 = vld [vmem:[%s11 + $0x10] sm:$0xf]
        %v1441 = vld [vmem:[%s11 + $0x14] sm:$0xf]
        %v1442 = vld [vmem:[%s11 + $0x18] sm:$0xf]
        %v1443 = vld [vmem:[%s11 + $0x1c] sm:$0xf]
        %v1444 = vld [vmem:[%s11 + $0x20] sm:$0xf]
        %v1445 = vld [vmem:[%s11 + $0x24] sm:$0xf]
        %v1446 = vld [vmem:[%s11 + $0x28] sm:$0xf]
        %v1447 = vld [vmem:[%s11 + $0x2c] sm:$0xf]
        %v1448 = vld [vmem:[%s11 + $0x30] sm:$0xf]
        %v1449 = vld [vmem:[%s11 + $0x34] sm:$0xf]
        %v1450 = vld [vmem:[%s11 + $0x38] sm:$0xf]
        %v1451 = vld [vmem:[%s11 + $0x3c] sm:$0xf]
        %s1452 = scalar_lea.vmem %s10, 4
        %v1453 = vld [vmem:[%s1452] sm:$0xf]
        %v1455 = vsel %vm1407, %v1453, 0
        %1457 = vmatpush.msra.mxu0 0.0
        %1458 = vmatpush.msra.mxu0 0.0
        %1459 = vmatpush.msra.mxu0 0.0
        %1460 = vmatpush.msra.mxu0 0.0
        %1461 = vmatpush.msra.mxu0 0.0
        %1462 = vmatpush.msra.mxu0 0.0
        %1463 = vmatpush.msra.mxu0 0.0
        %1464 = vmatpush.msra.mxu0 0.0
        %1465 = vmatpush.msra.mxu0 0.0
        %1466 = vmatpush.msra.mxu0 0.0
        %1467 = vmatpush.msra.mxu0 0.0
        %1468 = vmatpush.msra.mxu0 0.0
        %1469 = vmatpush.msra.mxu0 0.0
        %1470 = vmatpush.msra.mxu0 0.0
        %1471 = vmatpush.msra.mxu0 0.0
        %1472 = vmatpush.msra.mxu0 %v1413
        %1473 = vmatmul.f32.gmra.mxu0 %v1455
        %v1474 = vpop.f32.mrf.mxu0
        %v1475 = vadd.f32 0.0, %v1474
        %1476 = vdwg.mxu0
        %v1477 = vpack.c.bf16 %v1475, %v1475
        %s1478 = scalar_lea.vmem %s11, 64
        %v1479 = vld [vmem:[%s1478] sm:$0xf]
        %v1480 = vld [vmem:[%s1478 + $0x4] sm:$0xf]
        %v1481 = vld [vmem:[%s1478 + $0x8] sm:$0xf]
        %v1482 = vld [vmem:[%s1478 + $0xc] sm:$0xf]
        %v1483 = vld [vmem:[%s1478 + $0x10] sm:$0xf]
        %v1484 = vld [vmem:[%s1478 + $0x14] sm:$0xf]
        %v1485 = vld [vmem:[%s1478 + $0x18] sm:$0xf]
        %v1486 = vld [vmem:[%s1478 + $0x1c] sm:$0xf]
        %v1487 = vld [vmem:[%s1478 + $0x20] sm:$0xf]
        %v1488 = vld [vmem:[%s1478 + $0x24] sm:$0xf]
        %v1489 = vld [vmem:[%s1478 + $0x28] sm:$0xf]
        %v1490 = vld [vmem:[%s1478 + $0x2c] sm:$0xf]
        %v1491 = vld [vmem:[%s1478 + $0x30] sm:$0xf]
        %v1492 = vld [vmem:[%s1478 + $0x34] sm:$0xf]
        %v1493 = vld [vmem:[%s1478 + $0x38] sm:$0xf]
        %v1494 = vld [vmem:[%s1478 + $0x3c] sm:$0xf]
        %v1511 = vunpack.c.l.b16 %v1479
        %v1512 = vunpack.c.l.b16 %v1480
        %v1513 = vunpack.c.l.b16 %v1481
        %v1514 = vunpack.c.l.b16 %v1482
        %v1515 = vunpack.c.l.b16 %v1483
        %v1516 = vunpack.c.l.b16 %v1484
        %v1517 = vunpack.c.l.b16 %v1485
        %v1518 = vunpack.c.l.b16 %v1486
        %v1519 = vunpack.c.l.b16 %v1487
        %v1520 = vunpack.c.l.b16 %v1488
        %v1521 = vunpack.c.l.b16 %v1489
        %v1522 = vunpack.c.l.b16 %v1490
        %v1523 = vunpack.c.l.b16 %v1491
        %v1524 = vunpack.c.l.b16 %v1492
        %v1525 = vunpack.c.l.b16 %v1493
        %v1526 = vunpack.c.l.b16 %v1494
        %v1527 = vpack.c.b16 %v1512, %v1511
        %v1528 = vpack.c.b16 %v1514, %v1513
        %v1529 = vpack.c.b16 %v1516, %v1515
        %v1530 = vpack.c.b16 %v1518, %v1517
        %v1531 = vpack.c.b16 %v1520, %v1519
        %v1532 = vpack.c.b16 %v1522, %v1521
        %v1533 = vpack.c.b16 %v1524, %v1523
        %v1534 = vpack.c.b16 %v1526, %v1525
        %1543 = vmatpush.bf16.msra.mxu0 %v1534
        %1544 = vmatpush.bf16.msra.mxu0 %v1533
        %1545 = vmatpush.bf16.msra.mxu0 %v1532
        %1546 = vmatpush.bf16.msra.mxu0 %v1531
        %1547 = vmatpush.bf16.msra.mxu0 %v1530
        %1548 = vmatpush.bf16.msra.mxu0 %v1529
        %1549 = vmatpush.bf16.msra.mxu0 %v1528
        %1550 = vmatpush.bf16.msra.mxu0 %v1527
        %1551 = vmatmul.bf16.gmra.mxu0 %v1477
        %v1552 = vpop.f32.mrf.mxu0
        %v1553 = vadd.f32 0.0, %v1552
        %v1554 = vpop.f32.mrf.mxu0
        %1555 = vdwg.mxu0
        %v1572 = vunpack.c.l.b16 %v1436
        %v1573 = vunpack.c.l.b16 %v1437
        %v1574 = vunpack.c.l.b16 %v1438
        %v1575 = vunpack.c.l.b16 %v1439
        %v1576 = vunpack.c.l.b16 %v1440
        %v1577 = vunpack.c.l.b16 %v1441
        %v1578 = vunpack.c.l.b16 %v1442
        %v1579 = vunpack.c.l.b16 %v1443
        %v1580 = vunpack.c.l.b16 %v1444
        %v1581 = vunpack.c.l.b16 %v1445
        %v1582 = vunpack.c.l.b16 %v1446
        %v1583 = vunpack.c.l.b16 %v1447
        %v1584 = vunpack.c.l.b16 %v1448
        %v1585 = vunpack.c.l.b16 %v1449
        %v1586 = vunpack.c.l.b16 %v1450
        %v1587 = vunpack.c.l.b16 %v1451
        %v1588 = vpack.c.b16 %v1573, %v1572
        %v1589 = vpack.c.b16 %v1575, %v1574
        %v1590 = vpack.c.b16 %v1577, %v1576
        %v1591 = vpack.c.b16 %v1579, %v1578
        %v1592 = vpack.c.b16 %v1581, %v1580
        %v1593 = vpack.c.b16 %v1583, %v1582
        %v1594 = vpack.c.b16 %v1585, %v1584
        %v1595 = vpack.c.b16 %v1587, %v1586
        %1604 = vmatpush.bf16.msra.mxu0 %v1595
        %1605 = vmatpush.bf16.msra.mxu0 %v1594
        %1606 = vmatpush.bf16.msra.mxu0 %v1593
        %1607 = vmatpush.bf16.msra.mxu0 %v1592
        %1608 = vmatpush.bf16.msra.mxu0 %v1591
        %1609 = vmatpush.bf16.msra.mxu0 %v1590
        %1610 = vmatpush.bf16.msra.mxu0 %v1589
        %1611 = vmatpush.bf16.msra.mxu0 %v1588
        %1612 = vmatmul.bf16.gmra.mxu0 %v1435
        %v1613 = vpop.f32.mrf.mxu0
        %v1614 = vadd.f32 %v1553, %v1613
        %v1615 = vpop.f32.mrf.mxu0
        %1616 = vdwg.mxu0
        %s1617 = scalar_lea.vmem %s10, 8
        %v1618 = vld [vmem:[%s1617] sm:$0xf]
        %v1620 = vsel %vm1407, %v1618, 0
        %1622 = vmatpush.msra.mxu0 0.0
        %1623 = vmatpush.msra.mxu0 0.0
        %1624 = vmatpush.msra.mxu0 0.0
        %1625 = vmatpush.msra.mxu0 0.0
        %1626 = vmatpush.msra.mxu0 0.0
        %1627 = vmatpush.msra.mxu0 0.0
        %1628 = vmatpush.msra.mxu0 0.0
        %1629 = vmatpush.msra.mxu0 0.0
        %1630 = vmatpush.msra.mxu0 0.0
        %1631 = vmatpush.msra.mxu0 0.0
        %1632 = vmatpush.msra.mxu0 0.0
        %1633 = vmatpush.msra.mxu0 0.0
        %1634 = vmatpush.msra.mxu0 0.0
        %1635 = vmatpush.msra.mxu0 0.0
        %1636 = vmatpush.msra.mxu0 0.0
        %1637 = vmatpush.msra.mxu0 %v1413
        %1638 = vmatmul.f32.gmra.mxu0 %v1620
        %v1639 = vpop.f32.mrf.mxu0
        %v1640 = vadd.f32 0.0, %v1639
        %1641 = vdwg.mxu0
        %v1642 = vpack.c.bf16 %v1640, %v1640
        %s1643 = scalar_lea.vmem %s11, 128
        %v1644 = vld [vmem:[%s1643] sm:$0xf]
        %v1645 = vld [vmem:[%s1643 + $0x4] sm:$0xf]
        %v1646 = vld [vmem:[%s1643 + $0x8] sm:$0xf]
        %v1647 = vld [vmem:[%s1643 + $0xc] sm:$0xf]
        %v1648 = vld [vmem:[%s1643 + $0x10] sm:$0xf]
        %v1649 = vld [vmem:[%s1643 + $0x14] sm:$0xf]
        %v1650 = vld [vmem:[%s1643 + $0x18] sm:$0xf]
        %v1651 = vld [vmem:[%s1643 + $0x1c] sm:$0xf]
        %v1652 = vld [vmem:[%s1643 + $0x20] sm:$0xf]
        %v1653 = vld [vmem:[%s1643 + $0x24] sm:$0xf]
        %v1654 = vld [vmem:[%s1643 + $0x28] sm:$0xf]
        %v1655 = vld [vmem:[%s1643 + $0x2c] sm:$0xf]
        %v1656 = vld [vmem:[%s1643 + $0x30] sm:$0xf]
        %v1657 = vld [vmem:[%s1643 + $0x34] sm:$0xf]
        %v1658 = vld [vmem:[%s1643 + $0x38] sm:$0xf]
        %v1659 = vld [vmem:[%s1643 + $0x3c] sm:$0xf]
        %v1676 = vunpack.c.l.b16 %v1644
        %v1677 = vunpack.c.l.b16 %v1645
        %v1678 = vunpack.c.l.b16 %v1646
        %v1679 = vunpack.c.l.b16 %v1647
        %v1680 = vunpack.c.l.b16 %v1648
        %v1681 = vunpack.c.l.b16 %v1649
        %v1682 = vunpack.c.l.b16 %v1650
        %v1683 = vunpack.c.l.b16 %v1651
        %v1684 = vunpack.c.l.b16 %v1652
        %v1685 = vunpack.c.l.b16 %v1653
        %v1686 = vunpack.c.l.b16 %v1654
        %v1687 = vunpack.c.l.b16 %v1655
        %v1688 = vunpack.c.l.b16 %v1656
        %v1689 = vunpack.c.l.b16 %v1657
        %v1690 = vunpack.c.l.b16 %v1658
        %v1691 = vunpack.c.l.b16 %v1659
        %v1692 = vpack.c.b16 %v1677, %v1676
        %v1693 = vpack.c.b16 %v1679, %v1678
        %v1694 = vpack.c.b16 %v1681, %v1680
        %v1695 = vpack.c.b16 %v1683, %v1682
        %v1696 = vpack.c.b16 %v1685, %v1684
        %v1697 = vpack.c.b16 %v1687, %v1686
        %v1698 = vpack.c.b16 %v1689, %v1688
        %v1699 = vpack.c.b16 %v1691, %v1690
        %1708 = vmatpush.bf16.msra.mxu0 %v1699
        %1709 = vmatpush.bf16.msra.mxu0 %v1698
        %1710 = vmatpush.bf16.msra.mxu0 %v1697
        %1711 = vmatpush.bf16.msra.mxu0 %v1696
        %1712 = vmatpush.bf16.msra.mxu0 %v1695
        %1713 = vmatpush.bf16.msra.mxu0 %v1694
        %1714 = vmatpush.bf16.msra.mxu0 %v1693
        %1715 = vmatpush.bf16.msra.mxu0 %v1692
        %1716 = vmatmul.bf16.gmra.mxu0 %v1642
        %v1717 = vpop.f32.mrf.mxu0
        %v1718 = vadd.f32 0.0, %v1717
        %v1719 = vpop.f32.mrf.mxu0
        %1720 = vdwg.mxu0
        %v1721 = vadd.f32 %v1614, %v1718
        %v1722 = vld [vmem:[%s12] sm:$0x1]
        %v1724 = vperm.slane %v1722, 0
        %v1726 = vadd.f32 %v1721, %v1724
        %v1727 = vmax.f32 %v1726, 0.0
        %v1728 = vld [vmem:[%s13] sm:$0xff]
        %v1730 = vsel %vm1085, %v1728, 0
        %v1733 = vsel %vm1089, %v1727, 0
        %1735 = vmatpush.msra.mxu0 0.0
        %1736 = vmatpush.msra.mxu0 0.0
        %1737 = vmatpush.msra.mxu0 0.0
        %1738 = vmatpush.msra.mxu0 0.0
        %1739 = vmatpush.msra.mxu0 0.0
        %1740 = vmatpush.msra.mxu0 0.0
        %1741 = vmatpush.msra.mxu0 0.0
        %1742 = vmatpush.msra.mxu0 0.0
        %1743 = vmatpush.msra.mxu0 0.0
        %1744 = vmatpush.msra.mxu0 0.0
        %1745 = vmatpush.msra.mxu0 0.0
        %1746 = vmatpush.msra.mxu0 0.0
        %1747 = vmatpush.msra.mxu0 0.0
        %1748 = vmatpush.msra.mxu0 0.0
        %1749 = vmatpush.msra.mxu0 0.0
        %1750 = vmatpush.msra.mxu0 %v1733
        %1751 = vmatmul.f32.gmra.mxu0 %v1730
        %v1752 = vpop.f32.mrf.mxu0
        %v1753 = vadd.f32 0.0, %v1752
        %1754 = vdwg.mxu0
        %v1755 = vpack.c.bf16 %v1753, %v1753
        %v1756 = vld [vmem:[%s14] sm:$0xf]
        %v1757 = vld [vmem:[%s14 + $0x4] sm:$0xf]
        %v1758 = vld [vmem:[%s14 + $0x8] sm:$0xf]
        %v1759 = vld [vmem:[%s14 + $0xc] sm:$0xf]
        %v1760 = vld [vmem:[%s14 + $0x10] sm:$0xf]
        %v1761 = vld [vmem:[%s14 + $0x14] sm:$0xf]
        %v1762 = vld [vmem:[%s14 + $0x18] sm:$0xf]
        %v1763 = vld [vmem:[%s14 + $0x1c] sm:$0xf]
        %v1764 = vld [vmem:[%s14 + $0x20] sm:$0xf]
        %v1765 = vld [vmem:[%s14 + $0x24] sm:$0xf]
        %v1766 = vld [vmem:[%s14 + $0x28] sm:$0xf]
        %v1767 = vld [vmem:[%s14 + $0x2c] sm:$0xf]
        %v1768 = vld [vmem:[%s14 + $0x30] sm:$0xf]
        %v1769 = vld [vmem:[%s14 + $0x34] sm:$0xf]
        %v1770 = vld [vmem:[%s14 + $0x38] sm:$0xf]
        %v1771 = vld [vmem:[%s14 + $0x3c] sm:$0xf]
        %s1772 = scalar_lea.vmem %s13, 8
        %v1773 = vld [vmem:[%s1772] sm:$0xff]
        %v1775 = vsel %vm1085, %v1773, 0
        %1777 = vmatpush.msra.mxu0 0.0
        %1778 = vmatpush.msra.mxu0 0.0
        %1779 = vmatpush.msra.mxu0 0.0
        %1780 = vmatpush.msra.mxu0 0.0
        %1781 = vmatpush.msra.mxu0 0.0
        %1782 = vmatpush.msra.mxu0 0.0
        %1783 = vmatpush.msra.mxu0 0.0
        %1784 = vmatpush.msra.mxu0 0.0
        %1785 = vmatpush.msra.mxu0 0.0
        %1786 = vmatpush.msra.mxu0 0.0
        %1787 = vmatpush.msra.mxu0 0.0
        %1788 = vmatpush.msra.mxu0 0.0
        %1789 = vmatpush.msra.mxu0 0.0
        %1790 = vmatpush.msra.mxu0 0.0
        %1791 = vmatpush.msra.mxu0 0.0
        %1792 = vmatpush.msra.mxu0 %v1733
        %1793 = vmatmul.f32.gmra.mxu0 %v1775
        %v1794 = vpop.f32.mrf.mxu0
        %v1795 = vadd.f32 0.0, %v1794
        %1796 = vdwg.mxu0
        %v1797 = vpack.c.bf16 %v1795, %v1795
        %s1798 = scalar_lea.vmem %s14, 64
        %v1799 = vld [vmem:[%s1798] sm:$0xf]
        %v1800 = vld [vmem:[%s1798 + $0x4] sm:$0xf]
        %v1801 = vld [vmem:[%s1798 + $0x8] sm:$0xf]
        %v1802 = vld [vmem:[%s1798 + $0xc] sm:$0xf]
        %v1803 = vld [vmem:[%s1798 + $0x10] sm:$0xf]
        %v1804 = vld [vmem:[%s1798 + $0x14] sm:$0xf]
        %v1805 = vld [vmem:[%s1798 + $0x18] sm:$0xf]
        %v1806 = vld [vmem:[%s1798 + $0x1c] sm:$0xf]
        %v1807 = vld [vmem:[%s1798 + $0x20] sm:$0xf]
        %v1808 = vld [vmem:[%s1798 + $0x24] sm:$0xf]
        %v1809 = vld [vmem:[%s1798 + $0x28] sm:$0xf]
        %v1810 = vld [vmem:[%s1798 + $0x2c] sm:$0xf]
        %v1811 = vld [vmem:[%s1798 + $0x30] sm:$0xf]
        %v1812 = vld [vmem:[%s1798 + $0x34] sm:$0xf]
        %v1813 = vld [vmem:[%s1798 + $0x38] sm:$0xf]
        %v1814 = vld [vmem:[%s1798 + $0x3c] sm:$0xf]
        %v1831 = vunpack.c.l.b16 %v1799
        %v1832 = vunpack.c.l.b16 %v1800
        %v1833 = vunpack.c.l.b16 %v1801
        %v1834 = vunpack.c.l.b16 %v1802
        %v1835 = vunpack.c.l.b16 %v1803
        %v1836 = vunpack.c.l.b16 %v1804
        %v1837 = vunpack.c.l.b16 %v1805
        %v1838 = vunpack.c.l.b16 %v1806
        %v1839 = vunpack.c.l.b16 %v1807
        %v1840 = vunpack.c.l.b16 %v1808
        %v1841 = vunpack.c.l.b16 %v1809
        %v1842 = vunpack.c.l.b16 %v1810
        %v1843 = vunpack.c.l.b16 %v1811
        %v1844 = vunpack.c.l.b16 %v1812
        %v1845 = vunpack.c.l.b16 %v1813
        %v1846 = vunpack.c.l.b16 %v1814
        %v1847 = vpack.c.b16 %v1832, %v1831
        %v1848 = vpack.c.b16 %v1834, %v1833
        %v1849 = vpack.c.b16 %v1836, %v1835
        %v1850 = vpack.c.b16 %v1838, %v1837
        %v1851 = vpack.c.b16 %v1840, %v1839
        %v1852 = vpack.c.b16 %v1842, %v1841
        %v1853 = vpack.c.b16 %v1844, %v1843
        %v1854 = vpack.c.b16 %v1846, %v1845
        %1863 = vmatpush.bf16.msra.mxu0 %v1854
        %1864 = vmatpush.bf16.msra.mxu0 %v1853
        %1865 = vmatpush.bf16.msra.mxu0 %v1852
        %1866 = vmatpush.bf16.msra.mxu0 %v1851
        %1867 = vmatpush.bf16.msra.mxu0 %v1850
        %1868 = vmatpush.bf16.msra.mxu0 %v1849
        %1869 = vmatpush.bf16.msra.mxu0 %v1848
        %1870 = vmatpush.bf16.msra.mxu0 %v1847
        %1871 = vmatmul.bf16.gmra.mxu0 %v1797
        %v1872 = vpop.f32.mrf.mxu0
        %v1873 = vadd.f32 0.0, %v1872
        %v1874 = vpop.f32.mrf.mxu0
        %1875 = vdwg.mxu0
        %v1892 = vunpack.c.l.b16 %v1756
        %v1893 = vunpack.c.l.b16 %v1757
        %v1894 = vunpack.c.l.b16 %v1758
        %v1895 = vunpack.c.l.b16 %v1759
        %v1896 = vunpack.c.l.b16 %v1760
        %v1897 = vunpack.c.l.b16 %v1761
        %v1898 = vunpack.c.l.b16 %v1762
        %v1899 = vunpack.c.l.b16 %v1763
        %v1900 = vunpack.c.l.b16 %v1764
        %v1901 = vunpack.c.l.b16 %v1765
        %v1902 = vunpack.c.l.b16 %v1766
        %v1903 = vunpack.c.l.b16 %v1767
        %v1904 = vunpack.c.l.b16 %v1768
        %v1905 = vunpack.c.l.b16 %v1769
        %v1906 = vunpack.c.l.b16 %v1770
        %v1907 = vunpack.c.l.b16 %v1771
        %v1908 = vpack.c.b16 %v1893, %v1892
        %v1909 = vpack.c.b16 %v1895, %v1894
        %v1910 = vpack.c.b16 %v1897, %v1896
        %v1911 = vpack.c.b16 %v1899, %v1898
        %v1912 = vpack.c.b16 %v1901, %v1900
        %v1913 = vpack.c.b16 %v1903, %v1902
        %v1914 = vpack.c.b16 %v1905, %v1904
        %v1915 = vpack.c.b16 %v1907, %v1906
        %1924 = vmatpush.bf16.msra.mxu0 %v1915
        %1925 = vmatpush.bf16.msra.mxu0 %v1914
        %1926 = vmatpush.bf16.msra.mxu0 %v1913
        %1927 = vmatpush.bf16.msra.mxu0 %v1912
        %1928 = vmatpush.bf16.msra.mxu0 %v1911
        %1929 = vmatpush.bf16.msra.mxu0 %v1910
        %1930 = vmatpush.bf16.msra.mxu0 %v1909
        %1931 = vmatpush.bf16.msra.mxu0 %v1908
        %1932 = vmatmul.bf16.gmra.mxu0 %v1755
        %v1933 = vpop.f32.mrf.mxu0
        %v1934 = vadd.f32 %v1873, %v1933
        %v1935 = vpop.f32.mrf.mxu0
        %1936 = vdwg.mxu0
        %s1937 = scalar_lea.vmem %s13, 16
        %v1938 = vld [vmem:[%s1937] sm:$0xff]
        %v1940 = vsel %vm1085, %v1938, 0
        %1942 = vmatpush.msra.mxu0 0.0
        %1943 = vmatpush.msra.mxu0 0.0
        %1944 = vmatpush.msra.mxu0 0.0
        %1945 = vmatpush.msra.mxu0 0.0
        %1946 = vmatpush.msra.mxu0 0.0
        %1947 = vmatpush.msra.mxu0 0.0
        %1948 = vmatpush.msra.mxu0 0.0
        %1949 = vmatpush.msra.mxu0 0.0
        %1950 = vmatpush.msra.mxu0 0.0
        %1951 = vmatpush.msra.mxu0 0.0
        %1952 = vmatpush.msra.mxu0 0.0
        %1953 = vmatpush.msra.mxu0 0.0
        %1954 = vmatpush.msra.mxu0 0.0
        %1955 = vmatpush.msra.mxu0 0.0
        %1956 = vmatpush.msra.mxu0 0.0
        %1957 = vmatpush.msra.mxu0 %v1733
        %1958 = vmatmul.f32.gmra.mxu0 %v1940
        %v1959 = vpop.f32.mrf.mxu0
        %v1960 = vadd.f32 0.0, %v1959
        %1961 = vdwg.mxu0
        %v1962 = vpack.c.bf16 %v1960, %v1960
        %s1963 = scalar_lea.vmem %s14, 128
        %v1964 = vld [vmem:[%s1963] sm:$0xf]
        %v1965 = vld [vmem:[%s1963 + $0x4] sm:$0xf]
        %v1966 = vld [vmem:[%s1963 + $0x8] sm:$0xf]
        %v1967 = vld [vmem:[%s1963 + $0xc] sm:$0xf]
        %v1968 = vld [vmem:[%s1963 + $0x10] sm:$0xf]
        %v1969 = vld [vmem:[%s1963 + $0x14] sm:$0xf]
        %v1970 = vld [vmem:[%s1963 + $0x18] sm:$0xf]
        %v1971 = vld [vmem:[%s1963 + $0x1c] sm:$0xf]
        %v1972 = vld [vmem:[%s1963 + $0x20] sm:$0xf]
        %v1973 = vld [vmem:[%s1963 + $0x24] sm:$0xf]
        %v1974 = vld [vmem:[%s1963 + $0x28] sm:$0xf]
        %v1975 = vld [vmem:[%s1963 + $0x2c] sm:$0xf]
        %v1976 = vld [vmem:[%s1963 + $0x30] sm:$0xf]
        %v1977 = vld [vmem:[%s1963 + $0x34] sm:$0xf]
        %v1978 = vld [vmem:[%s1963 + $0x38] sm:$0xf]
        %v1979 = vld [vmem:[%s1963 + $0x3c] sm:$0xf]
        %v1996 = vunpack.c.l.b16 %v1964
        %v1997 = vunpack.c.l.b16 %v1965
        %v1998 = vunpack.c.l.b16 %v1966
        %v1999 = vunpack.c.l.b16 %v1967
        %v2000 = vunpack.c.l.b16 %v1968
        %v2001 = vunpack.c.l.b16 %v1969
        %v2002 = vunpack.c.l.b16 %v1970
        %v2003 = vunpack.c.l.b16 %v1971
        %v2004 = vunpack.c.l.b16 %v1972
        %v2005 = vunpack.c.l.b16 %v1973
        %v2006 = vunpack.c.l.b16 %v1974
        %v2007 = vunpack.c.l.b16 %v1975
        %v2008 = vunpack.c.l.b16 %v1976
        %v2009 = vunpack.c.l.b16 %v1977
        %v2010 = vunpack.c.l.b16 %v1978
        %v2011 = vunpack.c.l.b16 %v1979
        %v2012 = vpack.c.b16 %v1997, %v1996
        %v2013 = vpack.c.b16 %v1999, %v1998
        %v2014 = vpack.c.b16 %v2001, %v2000
        %v2015 = vpack.c.b16 %v2003, %v2002
        %v2016 = vpack.c.b16 %v2005, %v2004
        %v2017 = vpack.c.b16 %v2007, %v2006
        %v2018 = vpack.c.b16 %v2009, %v2008
        %v2019 = vpack.c.b16 %v2011, %v2010
        %2028 = vmatpush.bf16.msra.mxu0 %v2019
        %2029 = vmatpush.bf16.msra.mxu0 %v2018
        %2030 = vmatpush.bf16.msra.mxu0 %v2017
        %2031 = vmatpush.bf16.msra.mxu0 %v2016
        %2032 = vmatpush.bf16.msra.mxu0 %v2015
        %2033 = vmatpush.bf16.msra.mxu0 %v2014
        %2034 = vmatpush.bf16.msra.mxu0 %v2013
        %2035 = vmatpush.bf16.msra.mxu0 %v2012
        %2036 = vmatmul.bf16.gmra.mxu0 %v1962
        %v2037 = vpop.f32.mrf.mxu0
        %v2038 = vadd.f32 0.0, %v2037
        %v2039 = vpop.f32.mrf.mxu0
        %2040 = vdwg.mxu0
        %v2041 = vadd.f32 %v1934, %v2038
        %v2042 = vld [vmem:[%s15] sm:$0x1]
        %v2044 = vperm.slane %v2042, 0
        %v2046 = vadd.f32 %v2041, %v2044
        %v2047 = vmax.f32 %v2046, 0.0
        %v2048 = vld [vmem:[%s16] sm:$0xff]
        %v2049 = vld [vmem:[%s16 + $0x8] sm:$0xff]
        %v2051 = vsel %vm767, %v2048, 0
        %v2054 = vsel %vm767, %v2049, 0
        %2056 = vmatpush.msra.mxu0 0.0
        %2057 = vmatpush.msra.mxu0 0.0
        %2058 = vmatpush.msra.mxu0 0.0
        %2059 = vmatpush.msra.mxu0 0.0
        %2060 = vmatpush.msra.mxu0 0.0
        %2061 = vmatpush.msra.mxu0 0.0
        %2062 = vmatpush.msra.mxu0 0.0
        %2063 = vmatpush.msra.mxu0 0.0
        %2064 = vmatpush.msra.mxu0 0.0
        %2065 = vmatpush.msra.mxu0 0.0
        %2066 = vmatpush.msra.mxu0 0.0
        %2067 = vmatpush.msra.mxu0 0.0
        %2068 = vmatpush.msra.mxu0 0.0
        %2069 = vmatpush.msra.mxu0 0.0
        %2070 = vmatpush.msra.mxu0 0.0
        %2071 = vmatpush.msra.mxu0 %v2047
        %2072 = vmatmul.f32.gmra.mxu0 %v2051
        %v2073 = vpop.f32.mrf.mxu0
        %v2074 = vadd.f32 0.0, %v2073
        %2075 = vmatmul.f32.gmra.mxu0 %v2054
        %v2076 = vpop.f32.mrf.mxu0
        %v2077 = vadd.f32 0.0, %v2076
        %2078 = vdwg.mxu0
        %v2079 = vpack.c.bf16 %v2077, %v2074
        %v2080 = vld [vmem:[%s17] sm:$0xf]
        %v2081 = vld [vmem:[%s17 + $0x4] sm:$0xf]
        %v2082 = vld [vmem:[%s17 + $0x8] sm:$0xf]
        %v2083 = vld [vmem:[%s17 + $0xc] sm:$0xf]
        %v2084 = vld [vmem:[%s17 + $0x10] sm:$0xf]
        %v2085 = vld [vmem:[%s17 + $0x14] sm:$0xf]
        %v2086 = vld [vmem:[%s17 + $0x18] sm:$0xf]
        %v2087 = vld [vmem:[%s17 + $0x1c] sm:$0xf]
        %v2088 = vld [vmem:[%s17 + $0x20] sm:$0xf]
        %v2089 = vld [vmem:[%s17 + $0x24] sm:$0xf]
        %v2090 = vld [vmem:[%s17 + $0x28] sm:$0xf]
        %v2091 = vld [vmem:[%s17 + $0x2c] sm:$0xf]
        %v2092 = vld [vmem:[%s17 + $0x30] sm:$0xf]
        %v2093 = vld [vmem:[%s17 + $0x34] sm:$0xf]
        %v2094 = vld [vmem:[%s17 + $0x38] sm:$0xf]
        %v2095 = vld [vmem:[%s17 + $0x3c] sm:$0xf]
        %s2096 = scalar_lea.vmem %s16, 16
        %v2097 = vld [vmem:[%s2096] sm:$0xff]
        %v2098 = vld [vmem:[%s2096 + $0x8] sm:$0xff]
        %v2100 = vsel %vm767, %v2097, 0
        %v2103 = vsel %vm767, %v2098, 0
        %2105 = vmatpush.msra.mxu0 0.0
        %2106 = vmatpush.msra.mxu0 0.0
        %2107 = vmatpush.msra.mxu0 0.0
        %2108 = vmatpush.msra.mxu0 0.0
        %2109 = vmatpush.msra.mxu0 0.0
        %2110 = vmatpush.msra.mxu0 0.0
        %2111 = vmatpush.msra.mxu0 0.0
        %2112 = vmatpush.msra.mxu0 0.0
        %2113 = vmatpush.msra.mxu0 0.0
        %2114 = vmatpush.msra.mxu0 0.0
        %2115 = vmatpush.msra.mxu0 0.0
        %2116 = vmatpush.msra.mxu0 0.0
        %2117 = vmatpush.msra.mxu0 0.0
        %2118 = vmatpush.msra.mxu0 0.0
        %2119 = vmatpush.msra.mxu0 0.0
        %2120 = vmatpush.msra.mxu0 %v2047
        %2121 = vmatmul.f32.gmra.mxu0 %v2100
        %v2122 = vpop.f32.mrf.mxu0
        %v2123 = vadd.f32 0.0, %v2122
        %2124 = vmatmul.f32.gmra.mxu0 %v2103
        %v2125 = vpop.f32.mrf.mxu0
        %v2126 = vadd.f32 0.0, %v2125
        %2127 = vdwg.mxu0
        %v2128 = vpack.c.bf16 %v2126, %v2123
        %s2129 = scalar_lea.vmem %s17, 64
        %v2130 = vld [vmem:[%s2129] sm:$0xf]
        %v2131 = vld [vmem:[%s2129 + $0x4] sm:$0xf]
        %v2132 = vld [vmem:[%s2129 + $0x8] sm:$0xf]
        %v2133 = vld [vmem:[%s2129 + $0xc] sm:$0xf]
        %v2134 = vld [vmem:[%s2129 + $0x10] sm:$0xf]
        %v2135 = vld [vmem:[%s2129 + $0x14] sm:$0xf]
        %v2136 = vld [vmem:[%s2129 + $0x18] sm:$0xf]
        %v2137 = vld [vmem:[%s2129 + $0x1c] sm:$0xf]
        %v2138 = vld [vmem:[%s2129 + $0x20] sm:$0xf]
        %v2139 = vld [vmem:[%s2129 + $0x24] sm:$0xf]
        %v2140 = vld [vmem:[%s2129 + $0x28] sm:$0xf]
        %v2141 = vld [vmem:[%s2129 + $0x2c] sm:$0xf]
        %v2142 = vld [vmem:[%s2129 + $0x30] sm:$0xf]
        %v2143 = vld [vmem:[%s2129 + $0x34] sm:$0xf]
        %v2144 = vld [vmem:[%s2129 + $0x38] sm:$0xf]
        %v2145 = vld [vmem:[%s2129 + $0x3c] sm:$0xf]
        %v2162 = vunpack.c.l.b16 %v2130
        %v2163 = vunpack.c.l.b16 %v2131
        %v2164 = vunpack.c.l.b16 %v2132
        %v2165 = vunpack.c.l.b16 %v2133
        %v2166 = vunpack.c.l.b16 %v2134
        %v2167 = vunpack.c.l.b16 %v2135
        %v2168 = vunpack.c.l.b16 %v2136
        %v2169 = vunpack.c.l.b16 %v2137
        %v2170 = vunpack.c.l.b16 %v2138
        %v2171 = vunpack.c.l.b16 %v2139
        %v2172 = vunpack.c.l.b16 %v2140
        %v2173 = vunpack.c.l.b16 %v2141
        %v2174 = vunpack.c.l.b16 %v2142
        %v2175 = vunpack.c.l.b16 %v2143
        %v2176 = vunpack.c.l.b16 %v2144
        %v2177 = vunpack.c.l.b16 %v2145
        %v2178 = vpack.c.b16 %v2163, %v2162
        %v2179 = vpack.c.b16 %v2165, %v2164
        %v2180 = vpack.c.b16 %v2167, %v2166
        %v2181 = vpack.c.b16 %v2169, %v2168
        %v2182 = vpack.c.b16 %v2171, %v2170
        %v2183 = vpack.c.b16 %v2173, %v2172
        %v2184 = vpack.c.b16 %v2175, %v2174
        %v2185 = vpack.c.b16 %v2177, %v2176
        %2194 = vmatpush.bf16.msra.mxu0 %v2185
        %2195 = vmatpush.bf16.msra.mxu0 %v2184
        %2196 = vmatpush.bf16.msra.mxu0 %v2183
        %2197 = vmatpush.bf16.msra.mxu0 %v2182
        %2198 = vmatpush.bf16.msra.mxu0 %v2181
        %2199 = vmatpush.bf16.msra.mxu0 %v2180
        %2200 = vmatpush.bf16.msra.mxu0 %v2179
        %2201 = vmatpush.bf16.msra.mxu0 %v2178
        %2202 = vmatmul.bf16.gmra.mxu0 %v2128
        %v2203 = vpop.f32.mrf.mxu0
        %v2204 = vadd.f32 0.0, %v2203
        %v2205 = vpop.f32.mrf.mxu0
        %v2206 = vadd.f32 0.0, %v2205
        %2207 = vdwg.mxu0
        %v2224 = vunpack.c.l.b16 %v2080
        %v2225 = vunpack.c.l.b16 %v2081
        %v2226 = vunpack.c.l.b16 %v2082
        %v2227 = vunpack.c.l.b16 %v2083
        %v2228 = vunpack.c.l.b16 %v2084
        %v2229 = vunpack.c.l.b16 %v2085
        %v2230 = vunpack.c.l.b16 %v2086
        %v2231 = vunpack.c.l.b16 %v2087
        %v2232 = vunpack.c.l.b16 %v2088
        %v2233 = vunpack.c.l.b16 %v2089
        %v2234 = vunpack.c.l.b16 %v2090
        %v2235 = vunpack.c.l.b16 %v2091
        %v2236 = vunpack.c.l.b16 %v2092
        %v2237 = vunpack.c.l.b16 %v2093
        %v2238 = vunpack.c.l.b16 %v2094
        %v2239 = vunpack.c.l.b16 %v2095
        %v2240 = vpack.c.b16 %v2225, %v2224
        %v2241 = vpack.c.b16 %v2227, %v2226
        %v2242 = vpack.c.b16 %v2229, %v2228
        %v2243 = vpack.c.b16 %v2231, %v2230
        %v2244 = vpack.c.b16 %v2233, %v2232
        %v2245 = vpack.c.b16 %v2235, %v2234
        %v2246 = vpack.c.b16 %v2237, %v2236
        %v2247 = vpack.c.b16 %v2239, %v2238
        %2256 = vmatpush.bf16.msra.mxu0 %v2247
        %2257 = vmatpush.bf16.msra.mxu0 %v2246
        %2258 = vmatpush.bf16.msra.mxu0 %v2245
        %2259 = vmatpush.bf16.msra.mxu0 %v2244
        %2260 = vmatpush.bf16.msra.mxu0 %v2243
        %2261 = vmatpush.bf16.msra.mxu0 %v2242
        %2262 = vmatpush.bf16.msra.mxu0 %v2241
        %2263 = vmatpush.bf16.msra.mxu0 %v2240
        %2264 = vmatmul.bf16.gmra.mxu0 %v2079
        %v2265 = vpop.f32.mrf.mxu0
        %v2266 = vadd.f32 %v2204, %v2265
        %v2267 = vpop.f32.mrf.mxu0
        %v2268 = vadd.f32 %v2206, %v2267
        %2269 = vdwg.mxu0
        %s2270 = scalar_lea.vmem %s16, 32
        %v2271 = vld [vmem:[%s2270] sm:$0xff]
        %v2272 = vld [vmem:[%s2270 + $0x8] sm:$0xff]
        %v2274 = vsel %vm767, %v2271, 0
        %v2277 = vsel %vm767, %v2272, 0
        %2279 = vmatpush.msra.mxu0 0.0
        %2280 = vmatpush.msra.mxu0 0.0
        %2281 = vmatpush.msra.mxu0 0.0
        %2282 = vmatpush.msra.mxu0 0.0
        %2283 = vmatpush.msra.mxu0 0.0
        %2284 = vmatpush.msra.mxu0 0.0
        %2285 = vmatpush.msra.mxu0 0.0
        %2286 = vmatpush.msra.mxu0 0.0
        %2287 = vmatpush.msra.mxu0 0.0
        %2288 = vmatpush.msra.mxu0 0.0
        %2289 = vmatpush.msra.mxu0 0.0
        %2290 = vmatpush.msra.mxu0 0.0
        %2291 = vmatpush.msra.mxu0 0.0
        %2292 = vmatpush.msra.mxu0 0.0
        %2293 = vmatpush.msra.mxu0 0.0
        %2294 = vmatpush.msra.mxu0 %v2047
        %2295 = vmatmul.f32.gmra.mxu0 %v2274
        %v2296 = vpop.f32.mrf.mxu0
        %v2297 = vadd.f32 0.0, %v2296
        %2298 = vmatmul.f32.gmra.mxu0 %v2277
        %v2299 = vpop.f32.mrf.mxu0
        %v2300 = vadd.f32 0.0, %v2299
        %2301 = vdwg.mxu0
        %v2302 = vpack.c.bf16 %v2300, %v2297
        %s2303 = scalar_lea.vmem %s17, 128
        %v2304 = vld [vmem:[%s2303] sm:$0xf]
        %v2305 = vld [vmem:[%s2303 + $0x4] sm:$0xf]
        %v2306 = vld [vmem:[%s2303 + $0x8] sm:$0xf]
        %v2307 = vld [vmem:[%s2303 + $0xc] sm:$0xf]
        %v2308 = vld [vmem:[%s2303 + $0x10] sm:$0xf]
        %v2309 = vld [vmem:[%s2303 + $0x14] sm:$0xf]
        %v2310 = vld [vmem:[%s2303 + $0x18] sm:$0xf]
        %v2311 = vld [vmem:[%s2303 + $0x1c] sm:$0xf]
        %v2312 = vld [vmem:[%s2303 + $0x20] sm:$0xf]
        %v2313 = vld [vmem:[%s2303 + $0x24] sm:$0xf]
        %v2314 = vld [vmem:[%s2303 + $0x28] sm:$0xf]
        %v2315 = vld [vmem:[%s2303 + $0x2c] sm:$0xf]
        %v2316 = vld [vmem:[%s2303 + $0x30] sm:$0xf]
        %v2317 = vld [vmem:[%s2303 + $0x34] sm:$0xf]
        %v2318 = vld [vmem:[%s2303 + $0x38] sm:$0xf]
        %v2319 = vld [vmem:[%s2303 + $0x3c] sm:$0xf]
        %v2336 = vunpack.c.l.b16 %v2304
        %v2337 = vunpack.c.l.b16 %v2305
        %v2338 = vunpack.c.l.b16 %v2306
        %v2339 = vunpack.c.l.b16 %v2307
        %v2340 = vunpack.c.l.b16 %v2308
        %v2341 = vunpack.c.l.b16 %v2309
        %v2342 = vunpack.c.l.b16 %v2310
        %v2343 = vunpack.c.l.b16 %v2311
        %v2344 = vunpack.c.l.b16 %v2312
        %v2345 = vunpack.c.l.b16 %v2313
        %v2346 = vunpack.c.l.b16 %v2314
        %v2347 = vunpack.c.l.b16 %v2315
        %v2348 = vunpack.c.l.b16 %v2316
        %v2349 = vunpack.c.l.b16 %v2317
        %v2350 = vunpack.c.l.b16 %v2318
        %v2351 = vunpack.c.l.b16 %v2319
        %v2352 = vpack.c.b16 %v2337, %v2336
        %v2353 = vpack.c.b16 %v2339, %v2338
        %v2354 = vpack.c.b16 %v2341, %v2340
        %v2355 = vpack.c.b16 %v2343, %v2342
        %v2356 = vpack.c.b16 %v2345, %v2344
        %v2357 = vpack.c.b16 %v2347, %v2346
        %v2358 = vpack.c.b16 %v2349, %v2348
        %v2359 = vpack.c.b16 %v2351, %v2350
        %2368 = vmatpush.bf16.msra.mxu0 %v2359
        %2369 = vmatpush.bf16.msra.mxu0 %v2358
        %2370 = vmatpush.bf16.msra.mxu0 %v2357
        %2371 = vmatpush.bf16.msra.mxu0 %v2356
        %2372 = vmatpush.bf16.msra.mxu0 %v2355
        %2373 = vmatpush.bf16.msra.mxu0 %v2354
        %2374 = vmatpush.bf16.msra.mxu0 %v2353
        %2375 = vmatpush.bf16.msra.mxu0 %v2352
        %2376 = vmatmul.bf16.gmra.mxu0 %v2302
        %v2377 = vpop.f32.mrf.mxu0
        %v2378 = vadd.f32 0.0, %v2377
        %v2379 = vpop.f32.mrf.mxu0
        %v2380 = vadd.f32 0.0, %v2379
        %2381 = vdwg.mxu0
        %v2382 = vadd.f32 %v2266, %v2378
        %v2383 = vadd.f32 %v2268, %v2380
        %v2384 = vld [vmem:[%s18] sm:$0x1]
        %v2386 = vperm.slane %v2384, 0
        %v2388 = vadd.f32 %v2382, %v2386
        %v2389 = vadd.f32 %v2383, %v2386
        %v2390 = vsub.f32 0.0, %v2388
        %v2391 = vsub.f32 0.0, %v2389
        %v2392 = vmul.f32 %v2390, 1.442695
        %v2393 = vpow.pop %v2392
        %v2394 = vmul.f32 %v2391, 1.442695
        %v2395 = vpow.pop %v2394
        %v2396 = vadd.f32 %v2393, 1.0
        %v2397 = vadd.f32 %v2395, 1.0
        %v2398 = vrcp.pop %v2396
        %v2399 = vmul.f32 %v2396, %v2398
        %v2400 = vsub.f32 1.0, %v2399
        %v2401 = vmul.f32 %v2398, %v2400
        %v2402 = vadd.f32 %v2398, %v2401
        %vm2403 = vweird.f32 %v2396
        %vm2404 = vweird.f32 %v2398
        %vm2405 = vmor %vm2403, %vm2404
        %v2406 = vsel %vm2405, %v2398, %v2402
        %v2407 = vand.u32 2147483647, %v2396
        %vm2408 = vcmp.eq.f32.partialorder %v2407, 8.507059e+37
        %v2409 = vand.u32 %v2396, 2147483648
        %v2410 = vor.u32 1.1754944e-38, %v2409
        %v2411 = vsel %vm2408, %v2410, %v2406
        %v2412 = vmul.f32 1.0, %v2411
        %v2413 = vrcp.pop %v2397
        %v2414 = vmul.f32 %v2397, %v2413
        %v2415 = vsub.f32 1.0, %v2414
        %v2416 = vmul.f32 %v2413, %v2415
        %v2417 = vadd.f32 %v2413, %v2416
        %vm2418 = vweird.f32 %v2397
        %vm2419 = vweird.f32 %v2413
        %vm2420 = vmor %vm2418, %vm2419
        %v2421 = vsel %vm2420, %v2413, %v2417
        %v2422 = vand.u32 2147483647, %v2397
        %vm2423 = vcmp.eq.f32.partialorder %v2422, 8.507059e+37
        %v2424 = vand.u32 %v2397, 2147483648
        %v2425 = vor.u32 1.1754944e-38, %v2424
        %v2426 = vsel %vm2423, %v2425, %v2421
        %v2427 = vmul.f32 1.0, %v2426
        %2428 = vst.msk [vmem:[%s596] sm:$0xff] %vm608, %v2412
        %2429 = vst.msk [vmem:[%s596 + $0x8] sm:$0xff] %vm608, %v2427
        %s2430 = sand.u32 %s445, 1
        %s2431 = scalar_lea.sflag [#allocation3], %s2430
        %s2432 = sand.u32 %s445, 1
        %s2433 = smul.addr %s2432, 16
        %s2434 = scalar_lea.vmem [#allocation2], %s2433
        // Predicated region
        $region97: #{autoencoder_forward.1} parent=95 // pred_check
          %p2435 = pneg %p455
        $region98: #{autoencoder_forward.1} parent=95 // pred_check_branch
          %2437 = sbr.rel (%p2435) target = $region100
        $region99: #{autoencoder_forward.1} parent=95 // pred_region
          %s2438 = smul.u32 2, %s33
          %2440 = vsyncadd %s2431, 0
          %s2441 = smul.addr %s2438, 8
          %s2442 = scalar_lea.hbm %s19, %s2441
          %s2443 = sshll.u32 %s2434, 4
          %s2444 = int_to_ptr.vmem [resolvable:$true] %s2443
          %s2445 = sshll.u32 %s2442, 4
          %s2446 = int_to_ptr.hbm [resolvable:$true] %s2445
          %2451 = dma.vmem_to_hbm [thread:$0]  %s2444, 256, %s2446, %s2431, 128, 128, 8
        $region100: #{autoencoder_forward.1} parent=95 // pred_fallthru
          _
      $region96: #{autoencoder_forward.1} parent=5 // pred_fallthru
        _
      %p2452 = scmp.le.s32.totalorder 2, %s28
      // Predicated region
      $region101: #{autoencoder_forward.1} parent=5 // pred_check
        %p2453 = pneg %p2452
      $region102: #{autoencoder_forward.1} parent=5 // pred_check_branch
        %2455 = sbr.rel (%p2453) target = $region104
      $region103: #{autoencoder_forward.1} parent=5 // pred_region
        %s2456 = ssub.s32 %s28, 2
        // Predicated region
        $region105: #{autoencoder_forward.1} parent=103 // pred_check
          %p2457 = pneg %p461
        $region106: #{autoencoder_forward.1} parent=103 // pred_check_branch
          %2459 = sbr.rel (%p2457) target = $region108
        $region107: #{autoencoder_forward.1} parent=103 // pred_region
          %s2460 = sand.u32 %s446, 1
          %s2461 = scalar_lea.sflag [#allocation3], %s2460
          %s2462 = sand.u32 %s446, 1
          %s2463 = smul.addr %s2462, 16
          %s2464 = scalar_lea.vmem [#allocation2], %s2463
          %2466 = dma.done %s2461, 256
        $region108: #{autoencoder_forward.1} parent=103 // pred_fallthru
          _
      $region104: #{autoencoder_forward.1} parent=5 // pred_fallthru
        _
    $region6: #{autoencoder_forward.1} parent=1 // loop_footer
      %s32 = sadd.s32 1, %s28
    $region7: #{autoencoder_forward.1} parent=1 // loop_footer_branch
      %27 = sbr.rel target = $region3
    $region8: #{autoencoder_forward.1} parent=1 // loop_exit
      _
    %2467 = vsyncpa [#allocation3], 1
    %s2468 = scalar_lea.sflag [#allocation3], 1
    %2469 = vsyncpa %s2468, 1

</llo_original>
